<compile_context>
chip_gen: v6e
topology: v6e:2x2x1
jax: 0.10.0
libtpu: 0.0.40
codegen_flags: <defaults>
</compile_context>

<pallas_src>
import numpy as np
import jax
import jax.numpy as jnp
from jax.experimental import pallas as pl
from jax.experimental.pallas import tpu as pltpu

MTU = 1500            # Dataset_fgnet.MTU
NUM_EMBEDDINGS = 3100
HIDDEN = 64           # gin_hidden_units
ITER_NUMS = 3         # iteration_nums
NB_CLASSES = 53
NB_PAD = 128          # lane-dense padded class dim
BN_EPS = 1e-5


def _round_up(x, m):
    return ((x + m - 1) // m) * m


def dapp_gin_kernel(h_ref, a_ref, p_ref, w_ref, vec_ref, wf_ref, bf_ref, out_ref):
    """3 GIN iterations (shared layer) + sum-pooling + final classifier."""
    bf16 = jnp.bfloat16

    # Hoist all parameter loads out of the unrolled iteration loop.
    a = a_ref[...]                           # (Np, Np) bf16, (1+eps)*I already folded in
    p = p_ref[...]                           # (Gp, Np) bf16 graph membership
    w1 = w_ref[0]                            # (D, D) bf16
    w2 = w_ref[1]
    w3 = w_ref[2]
    vec = vec_ref[...]                       # (8, D) f32 slab of small per-feature vectors
    b1, b2, b3 = vec[0:1, :], vec[1:2, :], vec[2:3, :]
    bn_scale, bn_shift = vec[3:4, :], vec[4:5, :]

    h = h_ref[...]                           # (Np, D) bf16 node features
    # Accumulator starts at the (padded) classifier bias -> no concat needed.
    acc = jnp.broadcast_to(bf_ref[...], out_ref.shape)      # (Gp, NB_PAD) f32

    for it in range(ITER_NUMS):              # static unroll: SAME GIN layer reused
        # GINConv(sum, learn_eps): z = (1+eps)*h + A@h == A'@h, one MXU matmul.
        z = jnp.dot(a, h, preferred_element_type=jnp.float32)
        # DApp_MLP: 3 x (Linear + ReLU); Dropout(p=0.0) = identity.
        x = jnp.maximum(jnp.dot(z.astype(bf16), w1,
                                preferred_element_type=jnp.float32) + b1, 0.0)
        x = jnp.maximum(jnp.dot(x.astype(bf16), w2,
                                preferred_element_type=jnp.float32) + b2, 0.0)
        x = jnp.maximum(jnp.dot(x.astype(bf16), w3,
                                preferred_element_type=jnp.float32) + b3, 0.0)
        # BatchNorm1d (eval) pre-folded to scale/shift; f32 VPU work only.
        hf = x * bn_scale + bn_shift
        h = hf.astype(bf16)
        # graph sum-pooling + this iteration's slice of the final classifier.
        pooled = jnp.dot(p, h, preferred_element_type=jnp.float32)          # (Gp, D)
        acc = acc + jnp.dot(pooled.astype(bf16), wf_ref[it],
                            preferred_element_type=jnp.float32)              # (Gp, NB_PAD)

    out_ref[...] = acc


def dapp_classifier_forward(pkt_length, adj, pool, params):
    """pkt_length: (N,1) int32 node packet lengths; adj: (N,N) f32; pool: (G,N) f32."""
    D = HIDDEN
    N = adj.shape[0]
    G = pool.shape[0]
    Np = _round_up(N, 8)
    Gp = _round_up(G, 8)

    # Embedding lookup (gather) — plain-JAX glue.
    # TODO(synk): for realistic N, fuse this gather into the kernel via scalar-prefetched
    # indices (PrefetchScalarGridSpec) + a pl.Element row index_map, and tile A over node
    # rows with the row axis marked "parallel" (v7x has 2 TCs and only 64 MiB VMEM).
    idx = pkt_length.reshape(-1).astype(jnp.int32) + MTU
    h0 = jnp.take(params["emb"], idx, axis=0).astype(jnp.float32)           # (N, D)

    # Fold eps into the adjacency: (1+eps)*h + A@h == (A + (1+eps)*I) @ h.
    eps = params["eps"][0, 0]
    aeps = adj.astype(jnp.float32) + (1.0 + eps) * jnp.eye(N, dtype=jnp.float32)

    # Pad node/graph counts to sublane multiples; padded rows are all-zero and are never
    # referenced by real rows of A' or P, so they cannot influence the sliced output.
    h0p = jnp.zeros((Np, D), jnp.float32).at[:N, :].set(h0).astype(jnp.bfloat16)
    ap = jnp.zeros((Np, Np), jnp.float32).at[:N, :N].set(aeps).astype(jnp.bfloat16)
    pp = jnp.zeros((Gp, Np), jnp.float32).at[:G, :N].set(
        pool.astype(jnp.float32)).astype(jnp.bfloat16)

    # MLP weights stacked -> a single DMA; bf16 operands, f32 accumulation on the MXU.
    w_stack = jnp.stack([params["w1"], params["w2"], params["w3"]],
                        axis=0).astype(jnp.bfloat16)                         # (3, D, D)

    # BatchNorm folded to scale/shift; pack all small (1, D) vectors into one (8, D)
    # f32 slab (one vreg-sized DMA instead of five tiny ones).
    bn_scale = params["bn_gamma"] * jax.lax.rsqrt(params["bn_var"] + BN_EPS)
    bn_shift = params["bn_beta"] - params["bn_mean"] * bn_scale
    vec_slab = jnp.zeros((8, D), jnp.float32)
    vec_slab = vec_slab.at[0, :].set(params["b1"][0])
    vec_slab = vec_slab.at[1, :].set(params["b2"][0])
    vec_slab = vec_slab.at[2, :].set(params["b3"][0])
    vec_slab = vec_slab.at[3, :].set(bn_scale[0])
    vec_slab = vec_slab.at[4, :].set(bn_shift[0])

    # Final classifier: split wf per iteration (avoids the lane-crossing concat) and
    # pad the class dim 53 -> 128 so the output store is lane-dense.
    wf_stack = jnp.zeros((ITER_NUMS, D, NB_PAD), jnp.float32)
    for i in range(ITER_NUMS):
        wf_stack = wf_stack.at[i, :, :NB_CLASSES].set(params["wf"][i * D:(i + 1) * D, :])
    wf_stack = wf_stack.astype(jnp.bfloat16)
    bf_pad = jnp.zeros((1, NB_PAD), jnp.float32).at[:, :NB_CLASSES].set(params["bf"])

    args = (h0p, ap, pp, w_stack, vec_slab, wf_stack, bf_pad)
    out = pl.pallas_call(
        dapp_gin_kernel,
        out_shape=jax.ShapeDtypeStruct((Gp, NB_PAD), jnp.float32),
        in_specs=[pl.BlockSpec(memory_space=pltpu.MemorySpace.VMEM) for _ in args],
        out_specs=pl.BlockSpec(memory_space=pltpu.MemorySpace.VMEM),
    )(*args)
    return out[:G, :NB_CLASSES]


def reference_forward_f32(pkt_length, adj, pool, params):
    """Pure-f32 JAX reference mirroring the PyTorch module semantics exactly."""
    idx = pkt_length.reshape(-1).astype(jnp.int32) + MTU
    h = jnp.take(params["emb"], idx, axis=0).astype(jnp.float32)
    eps = params["eps"][0, 0]
    inv_std = jax.lax.rsqrt(params["bn_var"] + BN_EPS)
    feats = []
    for _ in range(ITER_NUMS):
        z = (1.0 + eps) * h + adj @ h
        x = jnp.maximum(z @ params["w1"] + params["b1"], 0.0)
        x = jnp.maximum(x @ params["w2"] + params["b2"], 0.0)
        x = jnp.maximum(x @ params["w3"] + params["b3"], 0.0)
        h = (x - params["bn_mean"]) * inv_std * params["bn_gamma"] + params["bn_beta"]
        feats.append(pool @ h)
    gcat = jnp.concatenate(feats, axis=-1)
    return gcat @ params["wf"] + params["bf"]


def reference_forward_bf16(pkt_length, adj, pool, params):
    """Reference that mirrors the kernel's bf16-operand / f32-accumulate numerics."""
    bf16 = jnp.bfloat16
    D = HIDDEN
    N = adj.shape[0]
    idx = pkt_length.reshape(-1).astype(jnp.int32) + MTU
    h = jnp.take(params["emb"], idx, axis=0).astype(jnp.float32).astype(bf16)
    eps = params["eps"][0, 0]
    aeps = (adj.astype(jnp.float32)
            + (1.0 + eps) * jnp.eye(N, dtype=jnp.float32)).astype(bf16)
    p = pool.astype(jnp.float32).astype(bf16)
    w1 = params["w1"].astype(bf16)
    w2 = params["w2"].astype(bf16)
    w3 = params["w3"].astype(bf16)
    bn_scale = params["bn_gamma"] * jax.lax.rsqrt(params["bn_var"] + BN_EPS)
    bn_shift = params["bn_beta"] - params["bn_mean"] * bn_scale
    out = jnp.broadcast_to(params["bf"], (pool.shape[0], NB_CLASSES)).astype(jnp.float32)
    for i in range(ITER_NUMS):
        z = jnp.dot(aeps, h, preferred_element_type=jnp.float32)
        x = jnp.maximum(jnp.dot(z.astype(bf16), w1,
                                preferred_element_type=jnp.float32) + params["b1"], 0.0)
        x = jnp.maximum(jnp.dot(x.astype(bf16), w2,
                                preferred_element_type=jnp.float32) + params["b2"], 0.0)
        x = jnp.maximum(jnp.dot(x.astype(bf16), w3,
                                preferred_element_type=jnp.float32) + params["b3"], 0.0)
        h = (x * bn_scale + bn_shift).astype(bf16)
        pooled = jnp.dot(p, h, preferred_element_type=jnp.float32)
        wf_i = params["wf"][i * D:(i + 1) * D, :].astype(bf16)
        out = out + jnp.dot(pooled.astype(bf16), wf_i, preferred_element_type=jnp.float32)
    return out


def init_params(key):
    ks = jax.random.split(key, 12)
    D = HIDDEN
    return {
        "emb": jax.random.normal(ks[0], (NUM_EMBEDDINGS, D), jnp.float32) * 0.1,
        "eps": jnp.zeros((1, 1), jnp.float32),             # GINConv init_eps = 0
        "w1": jax.random.normal(ks[1], (D, D), jnp.float32) * 0.1,
        "b1": jax.random.normal(ks[2], (1, D), jnp.float32) * 0.1,
        "w2": jax.random.normal(ks[3], (D, D), jnp.float32) * 0.1,
        "b2": jax.random.normal(ks[4], (1, D), jnp.float32) * 0.1,
        "w3": jax.random.normal(ks[5], (D, D), jnp.float32) * 0.1,
        "b3": jax.random.normal(ks[6], (1, D), jnp.float32) * 0.1,
        "bn_gamma": jax.random.normal(ks[7], (1, D), jnp.float32) * 0.1 + 1.0,
        "bn_beta": jax.random.normal(ks[8], (1, D), jnp.float32) * 0.1,
        "bn_mean": jnp.zeros((1, D), jnp.float32),
        "bn_var": jnp.ones((1, D), jnp.float32),
        "wf": jax.random.normal(ks[9], (ITER_NUMS * D, NB_CLASSES), jnp.float32) * 0.1,
        "bf": jax.random.normal(ks[10], (1, NB_CLASSES), jnp.float32) * 0.1,
    }


def build_graph(num_graphs=2, nodes_per_graph=16):
    """Two independent ring graphs, block-diagonal adjacency; pooling = membership."""
    N = num_graphs * nodes_per_graph
    A = np.zeros((N, N), np.float32)
    P = np.zeros((num_graphs, N), np.float32)
    for g in range(num_graphs):
        base = g * nodes_per_graph
        for k in range(nodes_per_graph):
            src = base + k
            dst = base + (k + 1) % nodes_per_graph
            A[dst, src] = 1.0   # edge src -> dst
            A[src, dst] = 1.0   # and reverse
        P[g, base:base + nodes_per_graph] = 1.0
    return jnp.asarray(A), jnp.asarray(P)


if __name__ == "__main__":
    key = jax.random.PRNGKey(0)
    pkey, dkey = jax.random.split(key)
    params = init_params(pkey)

    num_graphs, nodes_per_graph = 2, 16
    N = num_graphs * nodes_per_graph
    # node packet lengths in [-MTU, MTU] -> embedding indices in [0, 3000]
    pkt_length = jax.random.randint(dkey, (N, 1), -MTU, MTU + 1, dtype=jnp.int32)
    adj, pool = build_graph(num_graphs, nodes_per_graph)

    fwd = jax.jit(dapp_classifier_forward)
    out = jax.block_until_ready(fwd(pkt_length, adj, pool, params))
    assert out.shape == (num_graphs, NB_CLASSES)

    # Tight check against a reference that matches the kernel's bf16/f32 cast points.
    ref_bf16 = reference_forward_bf16(pkt_length, adj, pool, params)
    assert jnp.allclose(out, ref_bf16, atol=1e-2, rtol=1e-2), \
        "mismatch vs bf16-matched JAX reference"

    # Loose sanity check against the pure-f32 module semantics (bf16 MXU operands).
    ref_f32 = reference_forward_f32(pkt_length, adj, pool, params)
    assert jnp.allclose(out, ref_f32, atol=2.5e-1, rtol=1e-1), \
        "mismatch vs f32 JAX reference"

    print("KERNEL_OK")
</pallas_src>

<mosaic_0001>
module attributes {stable_mosaic.version = 11 : i64} {
  func.func @dapp_gin_kernel(%arg0: memref<32x64xbf16, #tpu.memory_space<vmem>>, %arg1: memref<32x32xbf16, #tpu.memory_space<vmem>>, %arg2: memref<8x32xbf16, #tpu.memory_space<vmem>>, %arg3: memref<3x64x64xbf16, #tpu.memory_space<vmem>>, %arg4: memref<8x64xf32, #tpu.memory_space<vmem>>, %arg5: memref<3x64x128xbf16, #tpu.memory_space<vmem>>, %arg6: memref<1x128xf32, #tpu.memory_space<vmem>>, %arg7: memref<8x128xf32, #tpu.memory_space<vmem>>) attributes {dimension_semantics = [], scalar_prefetch = 0 : i64, scratch_operands = 0 : i64, tpu.core_type = #tpu.core_type<tc>} {
    %c0 = arith.constant 0 : index
    %c0_0 = arith.constant 0 : index
    %0 = vector.load %arg1[%c0, %c0_0] : memref<32x32xbf16, #tpu.memory_space<vmem>>, vector<32x32xbf16>
    %c0_1 = arith.constant 0 : index
    %c0_2 = arith.constant 0 : index
    %1 = vector.load %arg2[%c0_1, %c0_2] : memref<8x32xbf16, #tpu.memory_space<vmem>>, vector<8x32xbf16>
    %c0_3 = arith.constant 0 : index
    %c0_4 = arith.constant 0 : index
    %c0_5 = arith.constant 0 : index
    %2 = vector.load %arg3[%c0_3, %c0_4, %c0_5] : memref<3x64x64xbf16, #tpu.memory_space<vmem>>, vector<1x64x64xbf16>
    %3 = vector.shape_cast %2 : vector<1x64x64xbf16> to vector<64x64xbf16>
    %c1 = arith.constant 1 : index
    %c0_6 = arith.constant 0 : index
    %c0_7 = arith.constant 0 : index
    %4 = vector.load %arg3[%c1, %c0_6, %c0_7] : memref<3x64x64xbf16, #tpu.memory_space<vmem>>, vector<1x64x64xbf16>
    %5 = vector.shape_cast %4 : vector<1x64x64xbf16> to vector<64x64xbf16>
    %c2 = arith.constant 2 : index
    %c0_8 = arith.constant 0 : index
    %c0_9 = arith.constant 0 : index
    %6 = vector.load %arg3[%c2, %c0_8, %c0_9] : memref<3x64x64xbf16, #tpu.memory_space<vmem>>, vector<1x64x64xbf16>
    %7 = vector.shape_cast %6 : vector<1x64x64xbf16> to vector<64x64xbf16>
    %c0_10 = arith.constant 0 : index
    %c0_11 = arith.constant 0 : index
    %8 = vector.load %arg4[%c0_10, %c0_11] : memref<8x64xf32, #tpu.memory_space<vmem>>, vector<8x64xf32>
    %9 = vector.extract_strided_slice %8 {offsets = [0, 0], sizes = [1, 64], strides = [1, 1]} : vector<8x64xf32> to vector<1x64xf32>
    %10 = vector.extract_strided_slice %8 {offsets = [1, 0], sizes = [1, 64], strides = [1, 1]} : vector<8x64xf32> to vector<1x64xf32>
    %11 = vector.extract_strided_slice %8 {offsets = [2, 0], sizes = [1, 64], strides = [1, 1]} : vector<8x64xf32> to vector<1x64xf32>
    %12 = vector.extract_strided_slice %8 {offsets = [3, 0], sizes = [1, 64], strides = [1, 1]} : vector<8x64xf32> to vector<1x64xf32>
    %13 = vector.extract_strided_slice %8 {offsets = [4, 0], sizes = [1, 64], strides = [1, 1]} : vector<8x64xf32> to vector<1x64xf32>
    %c0_12 = arith.constant 0 : index
    %c0_13 = arith.constant 0 : index
    %14 = vector.load %arg0[%c0_12, %c0_13] : memref<32x64xbf16, #tpu.memory_space<vmem>>, vector<32x64xbf16>
    %c0_14 = arith.constant 0 : index
    %c0_15 = arith.constant 0 : index
    %15 = vector.load %arg6[%c0_14, %c0_15] : memref<1x128xf32, #tpu.memory_space<vmem>>, vector<1x128xf32>
    %16 = vector.shape_cast %15 : vector<1x128xf32> to vector<1x128xf32>
    %17 = vector.broadcast %16 : vector<1x128xf32> to vector<8x128xf32>
    %cst = arith.constant dense<0.000000e+00> : vector<32x64xf32>
    %18 = tpu.matmul %0, %14, %cst {dimension_numbers = #tpu.dot_dimension_numbers<[1], [0], [0], [1], [0, 0, 1, 1], [], []>} : vector<32x32xbf16>, vector<32x64xbf16>, vector<32x64xf32> -> vector<32x64xf32>
    %19 = arith.truncf %18 : vector<32x64xf32> to vector<32x64xbf16>
    %cst_16 = arith.constant dense<0.000000e+00> : vector<32x64xf32>
    %20 = tpu.matmul %19, %3, %cst_16 {dimension_numbers = #tpu.dot_dimension_numbers<[1], [0], [0], [1], [0, 0, 1, 1], [], []>} : vector<32x64xbf16>, vector<64x64xbf16>, vector<32x64xf32> -> vector<32x64xf32>
    %21 = vector.broadcast %9 : vector<1x64xf32> to vector<32x64xf32>
    %22 = arith.addf %20, %21 : vector<32x64xf32>
    %cst_17 = arith.constant 0.000000e+00 : f32
    %23 = vector.broadcast %cst_17 : f32 to vector<32x64xf32>
    %24 = arith.maximumf %22, %23 : vector<32x64xf32>
    %25 = arith.truncf %24 : vector<32x64xf32> to vector<32x64xbf16>
    %cst_18 = arith.constant dense<0.000000e+00> : vector<32x64xf32>
    %26 = tpu.matmul %25, %5, %cst_18 {dimension_numbers = #tpu.dot_dimension_numbers<[1], [0], [0], [1], [0, 0, 1, 1], [], []>} : vector<32x64xbf16>, vector<64x64xbf16>, vector<32x64xf32> -> vector<32x64xf32>
    %27 = vector.broadcast %10 : vector<1x64xf32> to vector<32x64xf32>
    %28 = arith.addf %26, %27 : vector<32x64xf32>
    %cst_19 = arith.constant 0.000000e+00 : f32
    %29 = vector.broadcast %cst_19 : f32 to vector<32x64xf32>
    %30 = arith.maximumf %28, %29 : vector<32x64xf32>
    %31 = arith.truncf %30 : vector<32x64xf32> to vector<32x64xbf16>
    %cst_20 = arith.constant dense<0.000000e+00> : vector<32x64xf32>
    %32 = tpu.matmul %31, %7, %cst_20 {dimension_numbers = #tpu.dot_dimension_numbers<[1], [0], [0], [1], [0, 0, 1, 1], [], []>} : vector<32x64xbf16>, vector<64x64xbf16>, vector<32x64xf32> -> vector<32x64xf32>
    %33 = vector.broadcast %11 : vector<1x64xf32> to vector<32x64xf32>
    %34 = arith.addf %32, %33 : vector<32x64xf32>
    %cst_21 = arith.constant 0.000000e+00 : f32
    %35 = vector.broadcast %cst_21 : f32 to vector<32x64xf32>
    %36 = arith.maximumf %34, %35 : vector<32x64xf32>
    %37 = vector.broadcast %12 : vector<1x64xf32> to vector<32x64xf32>
    %38 = arith.mulf %36, %37 : vector<32x64xf32>
    %39 = vector.broadcast %13 : vector<1x64xf32> to vector<32x64xf32>
    %40 = arith.addf %38, %39 : vector<32x64xf32>
    %41 = arith.truncf %40 : vector<32x64xf32> to vector<32x64xbf16>
    %cst_22 = arith.constant dense<0.000000e+00> : vector<8x64xf32>
    %42 = tpu.matmul %1, %41, %cst_22 {dimension_numbers = #tpu.dot_dimension_numbers<[1], [0], [0], [1], [0, 0, 1, 1], [], []>} : vector<8x32xbf16>, vector<32x64xbf16>, vector<8x64xf32> -> vector<8x64xf32>
    %43 = arith.truncf %42 : vector<8x64xf32> to vector<8x64xbf16>
    %c0_23 = arith.constant 0 : index
    %c0_24 = arith.constant 0 : index
    %c0_25 = arith.constant 0 : index
    %44 = vector.load %arg5[%c0_23, %c0_24, %c0_25] : memref<3x64x128xbf16, #tpu.memory_space<vmem>>, vector<1x64x128xbf16>
    %45 = vector.shape_cast %44 : vector<1x64x128xbf16> to vector<64x128xbf16>
    %cst_26 = arith.constant dense<0.000000e+00> : vector<8x128xf32>
    %46 = tpu.matmul %43, %45, %cst_26 {dimension_numbers = #tpu.dot_dimension_numbers<[1], [0], [0], [1], [0, 0, 1, 1], [], []>} : vector<8x64xbf16>, vector<64x128xbf16>, vector<8x128xf32> -> vector<8x128xf32>
    %47 = arith.addf %17, %46 : vector<8x128xf32>
    %cst_27 = arith.constant dense<0.000000e+00> : vector<32x64xf32>
    %48 = tpu.matmul %0, %41, %cst_27 {dimension_numbers = #tpu.dot_dimension_numbers<[1], [0], [0], [1], [0, 0, 1, 1], [], []>} : vector<32x32xbf16>, vector<32x64xbf16>, vector<32x64xf32> -> vector<32x64xf32>
    %49 = arith.truncf %48 : vector<32x64xf32> to vector<32x64xbf16>
    %cst_28 = arith.constant dense<0.000000e+00> : vector<32x64xf32>
    %50 = tpu.matmul %49, %3, %cst_28 {dimension_numbers = #tpu.dot_dimension_numbers<[1], [0], [0], [1], [0, 0, 1, 1], [], []>} : vector<32x64xbf16>, vector<64x64xbf16>, vector<32x64xf32> -> vector<32x64xf32>
    %51 = vector.broadcast %9 : vector<1x64xf32> to vector<32x64xf32>
    %52 = arith.addf %50, %51 : vector<32x64xf32>
    %cst_29 = arith.constant 0.000000e+00 : f32
    %53 = vector.broadcast %cst_29 : f32 to vector<32x64xf32>
    %54 = arith.maximumf %52, %53 : vector<32x64xf32>
    %55 = arith.truncf %54 : vector<32x64xf32> to vector<32x64xbf16>
    %cst_30 = arith.constant dense<0.000000e+00> : vector<32x64xf32>
    %56 = tpu.matmul %55, %5, %cst_30 {dimension_numbers = #tpu.dot_dimension_numbers<[1], [0], [0], [1], [0, 0, 1, 1], [], []>} : vector<32x64xbf16>, vector<64x64xbf16>, vector<32x64xf32> -> vector<32x64xf32>
    %57 = vector.broadcast %10 : vector<1x64xf32> to vector<32x64xf32>
    %58 = arith.addf %56, %57 : vector<32x64xf32>
    %cst_31 = arith.constant 0.000000e+00 : f32
    %59 = vector.broadcast %cst_31 : f32 to vector<32x64xf32>
    %60 = arith.maximumf %58, %59 : vector<32x64xf32>
    %61 = arith.truncf %60 : vector<32x64xf32> to vector<32x64xbf16>
    %cst_32 = arith.constant dense<0.000000e+00> : vector<32x64xf32>
    %62 = tpu.matmul %61, %7, %cst_32 {dimension_numbers = #tpu.dot_dimension_numbers<[1], [0], [0], [1], [0, 0, 1, 1], [], []>} : vector<32x64xbf16>, vector<64x64xbf16>, vector<32x64xf32> -> vector<32x64xf32>
    %63 = vector.broadcast %11 : vector<1x64xf32> to vector<32x64xf32>
    %64 = arith.addf %62, %63 : vector<32x64xf32>
    %cst_33 = arith.constant 0.000000e+00 : f32
    %65 = vector.broadcast %cst_33 : f32 to vector<32x64xf32>
    %66 = arith.maximumf %64, %65 : vector<32x64xf32>
    %67 = vector.broadcast %12 : vector<1x64xf32> to vector<32x64xf32>
    %68 = arith.mulf %66, %67 : vector<32x64xf32>
    %69 = vector.broadcast %13 : vector<1x64xf32> to vector<32x64xf32>
    %70 = arith.addf %68, %69 : vector<32x64xf32>
    %71 = arith.truncf %70 : vector<32x64xf32> to vector<32x64xbf16>
    %cst_34 = arith.constant dense<0.000000e+00> : vector<8x64xf32>
    %72 = tpu.matmul %1, %71, %cst_34 {dimension_numbers = #tpu.dot_dimension_numbers<[1], [0], [0], [1], [0, 0, 1, 1], [], []>} : vector<8x32xbf16>, vector<32x64xbf16>, vector<8x64xf32> -> vector<8x64xf32>
    %73 = arith.truncf %72 : vector<8x64xf32> to vector<8x64xbf16>
    %c1_35 = arith.constant 1 : index
    %c0_36 = arith.constant 0 : index
    %c0_37 = arith.constant 0 : index
    %74 = vector.load %arg5[%c1_35, %c0_36, %c0_37] : memref<3x64x128xbf16, #tpu.memory_space<vmem>>, vector<1x64x128xbf16>
    %75 = vector.shape_cast %74 : vector<1x64x128xbf16> to vector<64x128xbf16>
    %cst_38 = arith.constant dense<0.000000e+00> : vector<8x128xf32>
    %76 = tpu.matmul %73, %75, %cst_38 {dimension_numbers = #tpu.dot_dimension_numbers<[1], [0], [0], [1], [0, 0, 1, 1], [], []>} : vector<8x64xbf16>, vector<64x128xbf16>, vector<8x128xf32> -> vector<8x128xf32>
    %77 = arith.addf %47, %76 : vector<8x128xf32>
    %cst_39 = arith.constant dense<0.000000e+00> : vector<32x64xf32>
    %78 = tpu.matmul %0, %71, %cst_39 {dimension_numbers = #tpu.dot_dimension_numbers<[1], [0], [0], [1], [0, 0, 1, 1], [], []>} : vector<32x32xbf16>, vector<32x64xbf16>, vector<32x64xf32> -> vector<32x64xf32>
    %79 = arith.truncf %78 : vector<32x64xf32> to vector<32x64xbf16>
    %cst_40 = arith.constant dense<0.000000e+00> : vector<32x64xf32>
    %80 = tpu.matmul %79, %3, %cst_40 {dimension_numbers = #tpu.dot_dimension_numbers<[1], [0], [0], [1], [0, 0, 1, 1], [], []>} : vector<32x64xbf16>, vector<64x64xbf16>, vector<32x64xf32> -> vector<32x64xf32>
    %81 = vector.broadcast %9 : vector<1x64xf32> to vector<32x64xf32>
    %82 = arith.addf %80, %81 : vector<32x64xf32>
    %cst_41 = arith.constant 0.000000e+00 : f32
    %83 = vector.broadcast %cst_41 : f32 to vector<32x64xf32>
    %84 = arith.maximumf %82, %83 : vector<32x64xf32>
    %85 = arith.truncf %84 : vector<32x64xf32> to vector<32x64xbf16>
    %cst_42 = arith.constant dense<0.000000e+00> : vector<32x64xf32>
    %86 = tpu.matmul %85, %5, %cst_42 {dimension_numbers = #tpu.dot_dimension_numbers<[1], [0], [0], [1], [0, 0, 1, 1], [], []>} : vector<32x64xbf16>, vector<64x64xbf16>, vector<32x64xf32> -> vector<32x64xf32>
    %87 = vector.broadcast %10 : vector<1x64xf32> to vector<32x64xf32>
    %88 = arith.addf %86, %87 : vector<32x64xf32>
    %cst_43 = arith.constant 0.000000e+00 : f32
    %89 = vector.broadcast %cst_43 : f32 to vector<32x64xf32>
    %90 = arith.maximumf %88, %89 : vector<32x64xf32>
    %91 = arith.truncf %90 : vector<32x64xf32> to vector<32x64xbf16>
    %cst_44 = arith.constant dense<0.000000e+00> : vector<32x64xf32>
    %92 = tpu.matmul %91, %7, %cst_44 {dimension_numbers = #tpu.dot_dimension_numbers<[1], [0], [0], [1], [0, 0, 1, 1], [], []>} : vector<32x64xbf16>, vector<64x64xbf16>, vector<32x64xf32> -> vector<32x64xf32>
    %93 = vector.broadcast %11 : vector<1x64xf32> to vector<32x64xf32>
    %94 = arith.addf %92, %93 : vector<32x64xf32>
    %cst_45 = arith.constant 0.000000e+00 : f32
    %95 = vector.broadcast %cst_45 : f32 to vector<32x64xf32>
    %96 = arith.maximumf %94, %95 : vector<32x64xf32>
    %97 = vector.broadcast %12 : vector<1x64xf32> to vector<32x64xf32>
    %98 = arith.mulf %96, %97 : vector<32x64xf32>
    %99 = vector.broadcast %13 : vector<1x64xf32> to vector<32x64xf32>
    %100 = arith.addf %98, %99 : vector<32x64xf32>
    %101 = arith.truncf %100 : vector<32x64xf32> to vector<32x64xbf16>
    %cst_46 = arith.constant dense<0.000000e+00> : vector<8x64xf32>
    %102 = tpu.matmul %1, %101, %cst_46 {dimension_numbers = #tpu.dot_dimension_numbers<[1], [0], [0], [1], [0, 0, 1, 1], [], []>} : vector<8x32xbf16>, vector<32x64xbf16>, vector<8x64xf32> -> vector<8x64xf32>
    %103 = arith.truncf %102 : vector<8x64xf32> to vector<8x64xbf16>
    %c2_47 = arith.constant 2 : index
    %c0_48 = arith.constant 0 : index
    %c0_49 = arith.constant 0 : index
    %104 = vector.load %arg5[%c2_47, %c0_48, %c0_49] : memref<3x64x128xbf16, #tpu.memory_space<vmem>>, vector<1x64x128xbf16>
    %105 = vector.shape_cast %104 : vector<1x64x128xbf16> to vector<64x128xbf16>
    %cst_50 = arith.constant dense<0.000000e+00> : vector<8x128xf32>
    %106 = tpu.matmul %103, %105, %cst_50 {dimension_numbers = #tpu.dot_dimension_numbers<[1], [0], [0], [1], [0, 0, 1, 1], [], []>} : vector<8x64xbf16>, vector<64x128xbf16>, vector<8x128xf32> -> vector<8x128xf32>
    %107 = arith.addf %77, %106 : vector<8x128xf32>
    %c0_51 = arith.constant 0 : index
    %c0_52 = arith.constant 0 : index
    %108 = vector.load %arg7[%c0_51, %c0_52] : memref<8x128xf32, #tpu.memory_space<vmem>>, vector<8x128xf32>
    tpu.vector_store %arg7[%c0_51, %c0_52], %107 {strides = array<i32>} : memref<8x128xf32, #tpu.memory_space<vmem>>, vector<8x128xf32>,
    return
  }
}

</mosaic_0001>

<llo_original>
// kernel: dapp_classifier_forward.1
$region0: #{dapp_classifier_forward.1}
  #allocation0 [shape = 'u32[]', space=smem, size = 0x4, offset = 0x4, fixed_abs, tag = 'smem constant byte address 0x4 - core index']
  #allocation1 [shape = 'u32[144,128]{1,0:T(1,128)}', space=vmem, size = 0x12000, scoped, tag = 'internal scratch']
  %s0 = inlined_call_operand.vmem [shape: bf16[32,64], index: 0, kind: input, shape index: {}]
  %s1 = inlined_call_operand.vmem [shape: bf16[32,32], index: 1, kind: input, shape index: {}]
  %s2 = inlined_call_operand.vmem [shape: bf16[8,32], index: 2, kind: input, shape index: {}]
  %s3 = inlined_call_operand.vmem [shape: bf16[3,64,64], index: 3, kind: input, shape index: {}]
  %s4 = inlined_call_operand.vmem [shape: f32[8,64], index: 4, kind: input, shape index: {}]
  %s5 = inlined_call_operand.vmem [shape: bf16[3,64,128], index: 5, kind: input, shape index: {}]
  %s6 = inlined_call_operand.vmem [shape: f32[1,128], index: 6, kind: input, shape index: {}]
  %s7 = inlined_call_operand.vmem [shape: f32[8,128], index: 7, kind: output, shape index: {}]
  %s8 = sld [smem:[#allocation0]]
  $region38: #{dapp_classifier_forward.1} parent=0
    _
  %s10 = ssub.s32 1, %s8
  %s11 = scalar_select 0, %s10, %s8
  // Predicated region
  $region2: #{dapp_classifier_forward.1} parent=0 // pred_check
    _
  $region3: #{dapp_classifier_forward.1} parent=0 // pred_check_branch
    %13 = sbr.rel (0) target = $region5
  $region4: #{dapp_classifier_forward.1} parent=0 // pred_region
    _
  $region5: #{dapp_classifier_forward.1} parent=0 // pred_fallthru
    _
  // Predicated region
  $region6: #{dapp_classifier_forward.1} parent=0 // pred_check
    _
  $region7: #{dapp_classifier_forward.1} parent=0 // pred_check_branch
    %15 = sbr.rel (0) target = $region9
  $region8: #{dapp_classifier_forward.1} parent=0 // pred_region
    _
  $region9: #{dapp_classifier_forward.1} parent=0 // pred_fallthru
    _
  // Predicated region
  $region10: #{dapp_classifier_forward.1} parent=0 // pred_check
    _
  $region11: #{dapp_classifier_forward.1} parent=0 // pred_check_branch
    %17 = sbr.rel (0) target = $region13
  $region12: #{dapp_classifier_forward.1} parent=0 // pred_region
    _
  $region13: #{dapp_classifier_forward.1} parent=0 // pred_fallthru
    _
  // Predicated region
  $region14: #{dapp_classifier_forward.1} parent=0 // pred_check
    _
  $region15: #{dapp_classifier_forward.1} parent=0 // pred_check_branch
    %19 = sbr.rel (0) target = $region17
  $region16: #{dapp_classifier_forward.1} parent=0 // pred_region
    _
  $region17: #{dapp_classifier_forward.1} parent=0 // pred_fallthru
    _
  // Predicated region
  $region18: #{dapp_classifier_forward.1} parent=0 // pred_check
    _
  $region19: #{dapp_classifier_forward.1} parent=0 // pred_check_branch
    %21 = sbr.rel (0) target = $region21
  $region20: #{dapp_classifier_forward.1} parent=0 // pred_region
    _
  $region21: #{dapp_classifier_forward.1} parent=0 // pred_fallthru
    _
  // Predicated region
  $region22: #{dapp_classifier_forward.1} parent=0 // pred_check
    _
  $region23: #{dapp_classifier_forward.1} parent=0 // pred_check_branch
    %23 = sbr.rel (0) target = $region25
  $region24: #{dapp_classifier_forward.1} parent=0 // pred_region
    _
  $region25: #{dapp_classifier_forward.1} parent=0 // pred_fallthru
    _
  // Predicated region
  $region26: #{dapp_classifier_forward.1} parent=0 // pred_check
    _
  $region27: #{dapp_classifier_forward.1} parent=0 // pred_check_branch
    %25 = sbr.rel (0) target = $region29
  $region28: #{dapp_classifier_forward.1} parent=0 // pred_region
    _
  $region29: #{dapp_classifier_forward.1} parent=0 // pred_fallthru
    _
  %v27 = vld [vmem:[%s1] sm:$0xf]
  %v28 = vld [vmem:[%s1 + $0x4] sm:$0xf]
  %v29 = vld [vmem:[%s1 + $0x8] sm:$0xf]
  %v30 = vld [vmem:[%s1 + $0xc] sm:$0xf]
  %v31 = vld [vmem:[%s2] sm:$0xf]
  %v32 = vld [vmem:[%s3] sm:$0xf]
  %v33 = vld [vmem:[%s3 + $0x4] sm:$0xf]
  %v34 = vld [vmem:[%s3 + $0x8] sm:$0xf]
  %v35 = vld [vmem:[%s3 + $0xc] sm:$0xf]
  %v36 = vld [vmem:[%s3 + $0x10] sm:$0xf]
  %v37 = vld [vmem:[%s3 + $0x14] sm:$0xf]
  %v38 = vld [vmem:[%s3 + $0x18] sm:$0xf]
  %v39 = vld [vmem:[%s3 + $0x1c] sm:$0xf]
  %s40 = scalar_lea.vmem %s3, 32
  %v41 = vld [vmem:[%s40] sm:$0xf]
  %v42 = vld [vmem:[%s40 + $0x4] sm:$0xf]
  %v43 = vld [vmem:[%s40 + $0x8] sm:$0xf]
  %v44 = vld [vmem:[%s40 + $0xc] sm:$0xf]
  %v45 = vld [vmem:[%s40 + $0x10] sm:$0xf]
  %v46 = vld [vmem:[%s40 + $0x14] sm:$0xf]
  %v47 = vld [vmem:[%s40 + $0x18] sm:$0xf]
  %v48 = vld [vmem:[%s40 + $0x1c] sm:$0xf]
  %s49 = scalar_lea.vmem %s3, 64
  %v50 = vld [vmem:[%s49] sm:$0xf]
  %v51 = vld [vmem:[%s49 + $0x4] sm:$0xf]
  %v52 = vld [vmem:[%s49 + $0x8] sm:$0xf]
  %v53 = vld [vmem:[%s49 + $0xc] sm:$0xf]
  %v54 = vld [vmem:[%s49 + $0x10] sm:$0xf]
  %v55 = vld [vmem:[%s49 + $0x14] sm:$0xf]
  %v56 = vld [vmem:[%s49 + $0x18] sm:$0xf]
  %v57 = vld [vmem:[%s49 + $0x1c] sm:$0xf]
  %v58 = vld [vmem:[%s4] sm:$0xff]
  %v59 = vld [vmem:[%s0] sm:$0xf]
  %v60 = vld [vmem:[%s0 + $0x4] sm:$0xf]
  %v61 = vld [vmem:[%s0 + $0x8] sm:$0xf]
  %v62 = vld [vmem:[%s0 + $0xc] sm:$0xf]
  %v63 = vld [vmem:[%s6] sm:$0x1]
  %v65 = vlaneseq
  %v66 = vshrl.u32 %v65, 7
  %v67 = vsub.s32 0, %v66
  %v68 = vrot.slane %v63, %v67
  %v74 = vunpack.c.l.b16 %v27
  %v75 = vunpack.c.l.b16 %v28
  %v76 = vunpack.c.l.b16 %v29
  %v77 = vunpack.c.l.b16 %v30
  %v78 = vpack.c.b16 %v75, %v74
  %v79 = vpack.c.b16 %v77, %v76
  %v84 = vunpack.c.l.b16 %v59
  %v85 = vunpack.c.l.b16 %v60
  %v86 = vunpack.c.l.b16 %v61
  %v87 = vunpack.c.l.b16 %v62
  %v88 = vpack.c.b16 %v85, %v84
  %v89 = vpack.c.b16 %v87, %v86
  %vm92 = vcmask 261120
  %v94 = vsel %vm92, %v78, 0
  %v97 = vsel %vm92, %v79, 0
  %99 = vmatprep.subr.bf16.mxu0 0
  %100 = vmatpush1.bf16.msra.mxu0 0
  %101 = vmatprep.subr.bf16.mxu0 0
  %102 = vmatpush1.bf16.msra.mxu0 0
  %103 = vmatprep.subr.bf16.mxu0 0
  %104 = vmatpush1.bf16.msra.mxu0 0
  %105 = vmatprep.subr.bf16.mxu0 0
  %106 = vmatpush1.bf16.msra.mxu0 0
  %107 = vmatprep.subr.bf16.mxu0 0
  %108 = vmatpush1.bf16.msra.mxu0 0
  %109 = vmatprep.subr.bf16.mxu0 0
  %110 = vmatpush1.bf16.msra.mxu0 0
  %111 = vmatprep.subr.bf16.mxu0 0
  %112 = vmatpush1.bf16.msra.mxu0 %v89
  %113 = vmatprep.subr.bf16.mxu0 0
  %114 = vmatpush1.bf16.msra.mxu0 %v88
  %115 = vmatprep.subr.bf16.mxu0 0
  %116 = vmatpush2.bf16.msra.mxu0 0
  %117 = vmatprep.subr.bf16.mxu0 0
  %118 = vmatpush2.bf16.msra.mxu0 0
  %119 = vmatprep.subr.bf16.mxu0 0
  %120 = vmatpush2.bf16.msra.mxu0 0
  %121 = vmatprep.subr.bf16.mxu0 0
  %122 = vmatpush2.bf16.msra.mxu0 0
  %123 = vmatprep.subr.bf16.mxu0 0
  %124 = vmatpush2.bf16.msra.mxu0 0
  %125 = vmatprep.subr.bf16.mxu0 0
  %126 = vmatpush2.bf16.msra.mxu0 0
  %127 = vmatprep.subr.bf16.mxu0 0
  %128 = vmatpush2.bf16.msra.mxu0 0
  %129 = vmatprep.subr.bf16.mxu0 0
  %130 = vmatpush2.bf16.msra.mxu0 0
  %131 = vmatprep.mubr.bf16.mxu0 0
  %132 = vmatmul.mubr.bf16.gmra.mxu0 %v94
  %v133 = vpop.f32.mrf.mxu0
  %v134 = vadd.f32 0.0, %v133
  %v135 = vpop.f32.mrf.mxu0
  %v136 = vpop.f32.mrf.mxu0
  %v137 = vadd.f32 0.0, %v136
  %v138 = vpop.f32.mrf.mxu0
  %139 = vmatprep.mubr.bf16.mxu0 0
  %140 = vmatmul.mubr.bf16.gmra.mxu0 %v97
  %v141 = vpop.f32.mrf.mxu0
  %v142 = vadd.f32 0.0, %v141
  %v143 = vpop.f32.mrf.mxu0
  %v144 = vpop.f32.mrf.mxu0
  %v145 = vadd.f32 0.0, %v144
  %v146 = vpop.f32.mrf.mxu0
  %147 = vdwg.mxu0
  %v148 = vpack.c.bf16 %v137, %v134
  %v149 = vpack.c.bf16 %v145, %v142
  %v150 = vlaneseq
  %v151 = vshrl.u32 %v150, 7
  %v152 = vsub.s32 0, %v151
  %v153 = vrot.slane %v58, %v152
  %v162 = vunpack.c.l.b16 %v32
  %v163 = vunpack.c.l.b16 %v33
  %v164 = vunpack.c.l.b16 %v34
  %v165 = vunpack.c.l.b16 %v35
  %v166 = vunpack.c.l.b16 %v36
  %v167 = vunpack.c.l.b16 %v37
  %v168 = vunpack.c.l.b16 %v38
  %v169 = vunpack.c.l.b16 %v39
  %v170 = vpack.c.b16 %v163, %v162
  %v171 = vpack.c.b16 %v165, %v164
  %v172 = vpack.c.b16 %v167, %v166
  %v173 = vpack.c.b16 %v169, %v168
  %vm178 = vcmask 523264
  %v180 = vsel %vm178, %v148, 0
  %v183 = vsel %vm178, %v149, 0
  %185 = vmatprep.subr.bf16.mxu0 0
  %186 = vmatpush1.bf16.msra.mxu0 0
  %187 = vmatprep.subr.bf16.mxu0 0
  %188 = vmatpush1.bf16.msra.mxu0 0
  %189 = vmatprep.subr.bf16.mxu0 0
  %190 = vmatpush1.bf16.msra.mxu0 0
  %191 = vmatprep.subr.bf16.mxu0 0
  %192 = vmatpush1.bf16.msra.mxu0 0
  %193 = vmatprep.subr.bf16.mxu0 0
  %194 = vmatpush1.bf16.msra.mxu0 %v173
  %195 = vmatprep.subr.bf16.mxu0 0
  %196 = vmatpush1.bf16.msra.mxu0 %v172
  %197 = vmatprep.subr.bf16.mxu0 0
  %198 = vmatpush1.bf16.msra.mxu0 %v171
  %199 = vmatprep.subr.bf16.mxu0 0
  %200 = vmatpush1.bf16.msra.mxu0 %v170
  %201 = vmatprep.subr.bf16.mxu0 0
  %202 = vmatpush2.bf16.msra.mxu0 0
  %203 = vmatprep.subr.bf16.mxu0 0
  %204 = vmatpush2.bf16.msra.mxu0 0
  %205 = vmatprep.subr.bf16.mxu0 0
  %206 = vmatpush2.bf16.msra.mxu0 0
  %207 = vmatprep.subr.bf16.mxu0 0
  %208 = vmatpush2.bf16.msra.mxu0 0
  %209 = vmatprep.subr.bf16.mxu0 0
  %210 = vmatpush2.bf16.msra.mxu0 0
  %211 = vmatprep.subr.bf16.mxu0 0
  %212 = vmatpush2.bf16.msra.mxu0 0
  %213 = vmatprep.subr.bf16.mxu0 0
  %214 = vmatpush2.bf16.msra.mxu0 0
  %215 = vmatprep.subr.bf16.mxu0 0
  %216 = vmatpush2.bf16.msra.mxu0 0
  %217 = vmatprep.mubr.bf16.mxu0 0
  %218 = vmatmul.mubr.bf16.gmra.mxu0 %v180
  %v219 = vpop.f32.mrf.mxu0
  %v220 = vadd.f32 %v153, %v219
  %v221 = vpop.f32.mrf.mxu0
  %v222 = vpop.f32.mrf.mxu0
  %v223 = vadd.f32 %v153, %v222
  %v224 = vpop.f32.mrf.mxu0
  %225 = vmatprep.mubr.bf16.mxu0 0
  %226 = vmatmul.mubr.bf16.gmra.mxu0 %v183
  %v227 = vpop.f32.mrf.mxu0
  %v228 = vadd.f32 %v153, %v227
  %v229 = vpop.f32.mrf.mxu0
  %v230 = vpop.f32.mrf.mxu0
  %v231 = vadd.f32 %v153, %v230
  %v232 = vpop.f32.mrf.mxu0
  %233 = vdwg.mxu0
  %v234 = vmax.f32 %v220, 0.0
  %v235 = vmax.f32 %v223, 0.0
  %v236 = vmax.f32 %v228, 0.0
  %v237 = vmax.f32 %v231, 0.0
  %v238 = vpack.c.bf16 %v235, %v234
  %v239 = vpack.c.bf16 %v237, %v236
  %v240 = vlaneseq
  %v241 = vshrl.u32 %v240, 7
  %v242 = vsub.s32 1, %v241
  %v243 = vrot.slane %v58, %v242
  %v252 = vunpack.c.l.b16 %v41
  %v253 = vunpack.c.l.b16 %v42
  %v254 = vunpack.c.l.b16 %v43
  %v255 = vunpack.c.l.b16 %v44
  %v256 = vunpack.c.l.b16 %v45
  %v257 = vunpack.c.l.b16 %v46
  %v258 = vunpack.c.l.b16 %v47
  %v259 = vunpack.c.l.b16 %v48
  %v260 = vpack.c.b16 %v253, %v252
  %v261 = vpack.c.b16 %v255, %v254
  %v262 = vpack.c.b16 %v257, %v256
  %v263 = vpack.c.b16 %v259, %v258
  %v269 = vsel %vm178, %v238, 0
  %v272 = vsel %vm178, %v239, 0
  %274 = vmatprep.subr.bf16.mxu0 0
  %275 = vmatpush1.bf16.msra.mxu0 0
  %276 = vmatprep.subr.bf16.mxu0 0
  %277 = vmatpush1.bf16.msra.mxu0 0
  %278 = vmatprep.subr.bf16.mxu0 0
  %279 = vmatpush1.bf16.msra.mxu0 0
  %280 = vmatprep.subr.bf16.mxu0 0
  %281 = vmatpush1.bf16.msra.mxu0 0
  %282 = vmatprep.subr.bf16.mxu0 0
  %283 = vmatpush1.bf16.msra.mxu0 %v263
  %284 = vmatprep.subr.bf16.mxu0 0
  %285 = vmatpush1.bf16.msra.mxu0 %v262
  %286 = vmatprep.subr.bf16.mxu0 0
  %287 = vmatpush1.bf16.msra.mxu0 %v261
  %288 = vmatprep.subr.bf16.mxu0 0
  %289 = vmatpush1.bf16.msra.mxu0 %v260
  %290 = vmatprep.subr.bf16.mxu0 0
  %291 = vmatpush2.bf16.msra.mxu0 0
  %292 = vmatprep.subr.bf16.mxu0 0
  %293 = vmatpush2.bf16.msra.mxu0 0
  %294 = vmatprep.subr.bf16.mxu0 0
  %295 = vmatpush2.bf16.msra.mxu0 0
  %296 = vmatprep.subr.bf16.mxu0 0
  %297 = vmatpush2.bf16.msra.mxu0 0
  %298 = vmatprep.subr.bf16.mxu0 0
  %299 = vmatpush2.bf16.msra.mxu0 0
  %300 = vmatprep.subr.bf16.mxu0 0
  %301 = vmatpush2.bf16.msra.mxu0 0
  %302 = vmatprep.subr.bf16.mxu0 0
  %303 = vmatpush2.bf16.msra.mxu0 0
  %304 = vmatprep.subr.bf16.mxu0 0
  %305 = vmatpush2.bf16.msra.mxu0 0
  %306 = vmatprep.mubr.bf16.mxu0 0
  %307 = vmatmul.mubr.bf16.gmra.mxu0 %v269
  %v308 = vpop.f32.mrf.mxu0
  %v309 = vadd.f32 %v243, %v308
  %v310 = vpop.f32.mrf.mxu0
  %v311 = vpop.f32.mrf.mxu0
  %v312 = vadd.f32 %v243, %v311
  %v313 = vpop.f32.mrf.mxu0
  %314 = vmatprep.mubr.bf16.mxu0 0
  %315 = vmatmul.mubr.bf16.gmra.mxu0 %v272
  %v316 = vpop.f32.mrf.mxu0
  %v317 = vadd.f32 %v243, %v316
  %v318 = vpop.f32.mrf.mxu0
  %v319 = vpop.f32.mrf.mxu0
  %v320 = vadd.f32 %v243, %v319
  %v321 = vpop.f32.mrf.mxu0
  %322 = vdwg.mxu0
  %v323 = vmax.f32 %v309, 0.0
  %v324 = vmax.f32 %v312, 0.0
  %v325 = vmax.f32 %v317, 0.0
  %v326 = vmax.f32 %v320, 0.0
  %v327 = vpack.c.bf16 %v324, %v323
  %v328 = vpack.c.bf16 %v326, %v325
  %v329 = vlaneseq
  %v330 = vshrl.u32 %v329, 7
  %v331 = vsub.s32 2, %v330
  %v332 = vrot.slane %v58, %v331
  %v341 = vunpack.c.l.b16 %v50
  %v342 = vunpack.c.l.b16 %v51
  %v343 = vunpack.c.l.b16 %v52
  %v344 = vunpack.c.l.b16 %v53
  %v345 = vunpack.c.l.b16 %v54
  %v346 = vunpack.c.l.b16 %v55
  %v347 = vunpack.c.l.b16 %v56
  %v348 = vunpack.c.l.b16 %v57
  %v349 = vpack.c.b16 %v342, %v341
  %v350 = vpack.c.b16 %v344, %v343
  %v351 = vpack.c.b16 %v346, %v345
  %v352 = vpack.c.b16 %v348, %v347
  %v358 = vsel %vm178, %v327, 0
  %v361 = vsel %vm178, %v328, 0
  %363 = vmatprep.subr.bf16.mxu0 0
  %364 = vmatpush1.bf16.msra.mxu0 0
  %365 = vmatprep.subr.bf16.mxu0 0
  %366 = vmatpush1.bf16.msra.mxu0 0
  %367 = vmatprep.subr.bf16.mxu0 0
  %368 = vmatpush1.bf16.msra.mxu0 0
  %369 = vmatprep.subr.bf16.mxu0 0
  %370 = vmatpush1.bf16.msra.mxu0 0
  %371 = vmatprep.subr.bf16.mxu0 0
  %372 = vmatpush1.bf16.msra.mxu0 %v352
  %373 = vmatprep.subr.bf16.mxu0 0
  %374 = vmatpush1.bf16.msra.mxu0 %v351
  %375 = vmatprep.subr.bf16.mxu0 0
  %376 = vmatpush1.bf16.msra.mxu0 %v350
  %377 = vmatprep.subr.bf16.mxu0 0
  %378 = vmatpush1.bf16.msra.mxu0 %v349
  %379 = vmatprep.subr.bf16.mxu0 0
  %380 = vmatpush2.bf16.msra.mxu0 0
  %381 = vmatprep.subr.bf16.mxu0 0
  %382 = vmatpush2.bf16.msra.mxu0 0
  %383 = vmatprep.subr.bf16.mxu0 0
  %384 = vmatpush2.bf16.msra.mxu0 0
  %385 = vmatprep.subr.bf16.mxu0 0
  %386 = vmatpush2.bf16.msra.mxu0 0
  %387 = vmatprep.subr.bf16.mxu0 0
  %388 = vmatpush2.bf16.msra.mxu0 0
  %389 = vmatprep.subr.bf16.mxu0 0
  %390 = vmatpush2.bf16.msra.mxu0 0
  %391 = vmatprep.subr.bf16.mxu0 0
  %392 = vmatpush2.bf16.msra.mxu0 0
  %393 = vmatprep.subr.bf16.mxu0 0
  %394 = vmatpush2.bf16.msra.mxu0 0
  %395 = vmatprep.mubr.bf16.mxu0 0
  %396 = vmatmul.mubr.bf16.gmra.mxu0 %v358
  %v397 = vpop.f32.mrf.mxu0
  %v398 = vadd.f32 %v332, %v397
  %v399 = vpop.f32.mrf.mxu0
  %v400 = vpop.f32.mrf.mxu0
  %v401 = vadd.f32 %v332, %v400
  %v402 = vpop.f32.mrf.mxu0
  %403 = vmatprep.mubr.bf16.mxu0 0
  %404 = vmatmul.mubr.bf16.gmra.mxu0 %v361
  %v405 = vpop.f32.mrf.mxu0
  %v406 = vadd.f32 %v332, %v405
  %v407 = vpop.f32.mrf.mxu0
  %v408 = vpop.f32.mrf.mxu0
  %v409 = vadd.f32 %v332, %v408
  %v410 = vpop.f32.mrf.mxu0
  %411 = vdwg.mxu0
  %v412 = vmax.f32 %v398, 0.0
  %v413 = vmax.f32 %v401, 0.0
  %v414 = vmax.f32 %v406, 0.0
  %v415 = vmax.f32 %v409, 0.0
  %v416 = vlaneseq
  %v417 = vshrl.u32 %v416, 7
  %v418 = vsub.s32 3, %v417
  %v419 = vrot.slane %v58, %v418
  %v420 = vmul.f32 %v412, %v419
  %v421 = vmul.f32 %v413, %v419
  %v422 = vmul.f32 %v414, %v419
  %v423 = vmul.f32 %v415, %v419
  %v424 = vlaneseq
  %v425 = vshrl.u32 %v424, 7
  %v426 = vsub.s32 4, %v425
  %v427 = vrot.slane %v58, %v426
  %v428 = vadd.f32 %v420, %v427
  %v429 = vadd.f32 %v421, %v427
  %v430 = vadd.f32 %v422, %v427
  %v431 = vadd.f32 %v423, %v427
  %v432 = vpack.c.bf16 %v429, %v428
  %v433 = vpack.c.bf16 %v431, %v430
  %v435 = vsel %vm92, %v31, 0
  %437 = vmatprep.subr.bf16.mxu0 0
  %438 = vmatpush1.bf16.msra.mxu0 0
  %439 = vmatprep.subr.bf16.mxu0 0
  %440 = vmatpush1.bf16.msra.mxu0 0
  %441 = vmatprep.subr.bf16.mxu0 0
  %442 = vmatpush1.bf16.msra.mxu0 0
  %443 = vmatprep.subr.bf16.mxu0 0
  %444 = vmatpush1.bf16.msra.mxu0 0
  %445 = vmatprep.subr.bf16.mxu0 0
  %446 = vmatpush1.bf16.msra.mxu0 0
  %447 = vmatprep.subr.bf16.mxu0 0
  %448 = vmatpush1.bf16.msra.mxu0 0
  %449 = vmatprep.subr.bf16.mxu0 0
  %450 = vmatpush1.bf16.msra.mxu0 %v433
  %451 = vmatprep.subr.bf16.mxu0 0
  %452 = vmatpush1.bf16.msra.mxu0 %v432
  %453 = vmatprep.subr.bf16.mxu0 0
  %454 = vmatpush2.bf16.msra.mxu0 0
  %455 = vmatprep.subr.bf16.mxu0 0
  %456 = vmatpush2.bf16.msra.mxu0 0
  %457 = vmatprep.subr.bf16.mxu0 0
  %458 = vmatpush2.bf16.msra.mxu0 0
  %459 = vmatprep.subr.bf16.mxu0 0
  %460 = vmatpush2.bf16.msra.mxu0 0
  %461 = vmatprep.subr.bf16.mxu0 0
  %462 = vmatpush2.bf16.msra.mxu0 0
  %463 = vmatprep.subr.bf16.mxu0 0
  %464 = vmatpush2.bf16.msra.mxu0 0
  %465 = vmatprep.subr.bf16.mxu0 0
  %466 = vmatpush2.bf16.msra.mxu0 0
  %467 = vmatprep.subr.bf16.mxu0 0
  %468 = vmatpush2.bf16.msra.mxu0 0
  %469 = vmatprep.mubr.bf16.mxu0 0
  %470 = vmatmul.mubr.bf16.gmra.mxu0 %v435
  %v471 = vpop.f32.mrf.mxu0
  %v472 = vadd.f32 0.0, %v471
  %v473 = vpop.f32.mrf.mxu0
  %v474 = vpop.f32.mrf.mxu0
  %v475 = vpop.f32.mrf.mxu0
  %476 = vdwg.mxu0
  %v477 = vpack.c.bf16 %v472, %v472
  %v478 = vld [vmem:[%s5] sm:$0xf]
  %v479 = vld [vmem:[%s5 + $0x4] sm:$0xf]
  %v480 = vld [vmem:[%s5 + $0x8] sm:$0xf]
  %v481 = vld [vmem:[%s5 + $0xc] sm:$0xf]
  %v482 = vld [vmem:[%s5 + $0x10] sm:$0xf]
  %v483 = vld [vmem:[%s5 + $0x14] sm:$0xf]
  %v484 = vld [vmem:[%s5 + $0x18] sm:$0xf]
  %v485 = vld [vmem:[%s5 + $0x1c] sm:$0xf]
  %v494 = vunpack.c.l.b16 %v478
  %v495 = vunpack.c.l.b16 %v479
  %v496 = vunpack.c.l.b16 %v480
  %v497 = vunpack.c.l.b16 %v481
  %v498 = vunpack.c.l.b16 %v482
  %v499 = vunpack.c.l.b16 %v483
  %v500 = vunpack.c.l.b16 %v484
  %v501 = vunpack.c.l.b16 %v485
  %v502 = vpack.c.b16 %v495, %v494
  %v503 = vpack.c.b16 %v497, %v496
  %v504 = vpack.c.b16 %v499, %v498
  %v505 = vpack.c.b16 %v501, %v500
  %v511 = vsel %vm178, %v477, 0
  %513 = vmatprep.subr.bf16.mxu0 0
  %514 = vmatpush1.bf16.msra.mxu0 0
  %515 = vmatprep.subr.bf16.mxu0 0
  %516 = vmatpush1.bf16.msra.mxu0 0
  %517 = vmatprep.subr.bf16.mxu0 0
  %518 = vmatpush1.bf16.msra.mxu0 0
  %519 = vmatprep.subr.bf16.mxu0 0
  %520 = vmatpush1.bf16.msra.mxu0 0
  %521 = vmatprep.subr.bf16.mxu0 0
  %522 = vmatpush1.bf16.msra.mxu0 %v505
  %523 = vmatprep.subr.bf16.mxu0 0
  %524 = vmatpush1.bf16.msra.mxu0 %v504
  %525 = vmatprep.subr.bf16.mxu0 0
  %526 = vmatpush1.bf16.msra.mxu0 %v503
  %527 = vmatprep.subr.bf16.mxu0 0
  %528 = vmatpush1.bf16.msra.mxu0 %v502
  %529 = vmatprep.subr.bf16.mxu0 0
  %530 = vmatpush2.bf16.msra.mxu0 0
  %531 = vmatprep.subr.bf16.mxu0 0
  %532 = vmatpush2.bf16.msra.mxu0 0
  %533 = vmatprep.subr.bf16.mxu0 0
  %534 = vmatpush2.bf16.msra.mxu0 0
  %535 = vmatprep.subr.bf16.mxu0 0
  %536 = vmatpush2.bf16.msra.mxu0 0
  %537 = vmatprep.subr.bf16.mxu0 0
  %538 = vmatpush2.bf16.msra.mxu0 0
  %539 = vmatprep.subr.bf16.mxu0 0
  %540 = vmatpush2.bf16.msra.mxu0 0
  %541 = vmatprep.subr.bf16.mxu0 0
  %542 = vmatpush2.bf16.msra.mxu0 0
  %543 = vmatprep.subr.bf16.mxu0 0
  %544 = vmatpush2.bf16.msra.mxu0 0
  %545 = vmatprep.mubr.bf16.mxu0 0
  %546 = vmatmul.mubr.bf16.gmra.mxu0 %v511
  %v547 = vpop.f32.mrf.mxu0
  %v548 = vadd.f32 0.0, %v547
  %v549 = vpop.f32.mrf.mxu0
  %v550 = vpop.f32.mrf.mxu0
  %v551 = vpop.f32.mrf.mxu0
  %552 = vdwg.mxu0
  %v553 = vadd.f32 %v68, %v548
  %554 = vmatprep.subr.bf16.mxu0 0
  %555 = vmatpush1.bf16.msra.mxu0 0
  %556 = vmatprep.subr.bf16.mxu0 0
  %557 = vmatpush1.bf16.msra.mxu0 0
  %558 = vmatprep.subr.bf16.mxu0 0
  %559 = vmatpush1.bf16.msra.mxu0 0
  %560 = vmatprep.subr.bf16.mxu0 0
  %561 = vmatpush1.bf16.msra.mxu0 0
  %562 = vmatprep.subr.bf16.mxu0 0
  %563 = vmatpush1.bf16.msra.mxu0 0
  %564 = vmatprep.subr.bf16.mxu0 0
  %565 = vmatpush1.bf16.msra.mxu0 0
  %566 = vmatprep.subr.bf16.mxu0 0
  %567 = vmatpush1.bf16.msra.mxu0 %v433
  %568 = vmatprep.subr.bf16.mxu0 0
  %569 = vmatpush1.bf16.msra.mxu0 %v432
  %570 = vmatprep.subr.bf16.mxu0 0
  %571 = vmatpush2.bf16.msra.mxu0 0
  %572 = vmatprep.subr.bf16.mxu0 0
  %573 = vmatpush2.bf16.msra.mxu0 0
  %574 = vmatprep.subr.bf16.mxu0 0
  %575 = vmatpush2.bf16.msra.mxu0 0
  %576 = vmatprep.subr.bf16.mxu0 0
  %577 = vmatpush2.bf16.msra.mxu0 0
  %578 = vmatprep.subr.bf16.mxu0 0
  %579 = vmatpush2.bf16.msra.mxu0 0
  %580 = vmatprep.subr.bf16.mxu0 0
  %581 = vmatpush2.bf16.msra.mxu0 0
  %582 = vmatprep.subr.bf16.mxu0 0
  %583 = vmatpush2.bf16.msra.mxu0 0
  %584 = vmatprep.subr.bf16.mxu0 0
  %585 = vmatpush2.bf16.msra.mxu0 0
  %586 = vmatprep.mubr.bf16.mxu0 0
  %587 = vmatmul.mubr.bf16.gmra.mxu0 %v94
  %v588 = vpop.f32.mrf.mxu0
  %v589 = vadd.f32 0.0, %v588
  %v590 = vpop.f32.mrf.mxu0
  %v591 = vpop.f32.mrf.mxu0
  %v592 = vadd.f32 0.0, %v591
  %v593 = vpop.f32.mrf.mxu0
  %594 = vmatprep.mubr.bf16.mxu0 0
  %595 = vmatmul.mubr.bf16.gmra.mxu0 %v97
  %v596 = vpop.f32.mrf.mxu0
  %v597 = vadd.f32 0.0, %v596
  %v598 = vpop.f32.mrf.mxu0
  %v599 = vpop.f32.mrf.mxu0
  %v600 = vadd.f32 0.0, %v599
  %v601 = vpop.f32.mrf.mxu0
  %602 = vdwg.mxu0
  %v603 = vpack.c.bf16 %v592, %v589
  %v604 = vpack.c.bf16 %v600, %v597
  %v606 = vsel %vm178, %v603, 0
  %v609 = vsel %vm178, %v604, 0
  %611 = vmatprep.subr.bf16.mxu0 0
  %612 = vmatpush1.bf16.msra.mxu0 0
  %613 = vmatprep.subr.bf16.mxu0 0
  %614 = vmatpush1.bf16.msra.mxu0 0
  %615 = vmatprep.subr.bf16.mxu0 0
  %616 = vmatpush1.bf16.msra.mxu0 0
  %617 = vmatprep.subr.bf16.mxu0 0
  %618 = vmatpush1.bf16.msra.mxu0 0
  %619 = vmatprep.subr.bf16.mxu0 0
  %620 = vmatpush1.bf16.msra.mxu0 %v173
  %621 = vmatprep.subr.bf16.mxu0 0
  %622 = vmatpush1.bf16.msra.mxu0 %v172
  %623 = vmatprep.subr.bf16.mxu0 0
  %624 = vmatpush1.bf16.msra.mxu0 %v171
  %625 = vmatprep.subr.bf16.mxu0 0
  %626 = vmatpush1.bf16.msra.mxu0 %v170
  %627 = vmatprep.subr.bf16.mxu0 0
  %628 = vmatpush2.bf16.msra.mxu0 0
  %629 = vmatprep.subr.bf16.mxu0 0
  %630 = vmatpush2.bf16.msra.mxu0 0
  %631 = vmatprep.subr.bf16.mxu0 0
  %632 = vmatpush2.bf16.msra.mxu0 0
  %633 = vmatprep.subr.bf16.mxu0 0
  %634 = vmatpush2.bf16.msra.mxu0 0
  %635 = vmatprep.subr.bf16.mxu0 0
  %636 = vmatpush2.bf16.msra.mxu0 0
  %637 = vmatprep.subr.bf16.mxu0 0
  %638 = vmatpush2.bf16.msra.mxu0 0
  %639 = vmatprep.subr.bf16.mxu0 0
  %640 = vmatpush2.bf16.msra.mxu0 0
  %641 = vmatprep.subr.bf16.mxu0 0
  %642 = vmatpush2.bf16.msra.mxu0 0
  %643 = vmatprep.mubr.bf16.mxu0 0
  %644 = vmatmul.mubr.bf16.gmra.mxu0 %v606
  %v645 = vpop.f32.mrf.mxu0
  %v646 = vadd.f32 %v153, %v645
  %v647 = vpop.f32.mrf.mxu0
  %v648 = vpop.f32.mrf.mxu0
  %v649 = vadd.f32 %v153, %v648
  %v650 = vpop.f32.mrf.mxu0
  %651 = vmatprep.mubr.bf16.mxu0 0
  %652 = vmatmul.mubr.bf16.gmra.mxu0 %v609
  %v653 = vpop.f32.mrf.mxu0
  %v654 = vadd.f32 %v153, %v653
  %v655 = vpop.f32.mrf.mxu0
  %v656 = vpop.f32.mrf.mxu0
  %v657 = vadd.f32 %v153, %v656
  %v658 = vpop.f32.mrf.mxu0
  %659 = vdwg.mxu0
  %v660 = vmax.f32 %v646, 0.0
  %v661 = vmax.f32 %v649, 0.0
  %v662 = vmax.f32 %v654, 0.0
  %v663 = vmax.f32 %v657, 0.0
  %v664 = vpack.c.bf16 %v661, %v660
  %v665 = vpack.c.bf16 %v663, %v662
  %v667 = vsel %vm178, %v664, 0
  %v670 = vsel %vm178, %v665, 0
  %672 = vmatprep.subr.bf16.mxu0 0
  %673 = vmatpush1.bf16.msra.mxu0 0
  %674 = vmatprep.subr.bf16.mxu0 0
  %675 = vmatpush1.bf16.msra.mxu0 0
  %676 = vmatprep.subr.bf16.mxu0 0
  %677 = vmatpush1.bf16.msra.mxu0 0
  %678 = vmatprep.subr.bf16.mxu0 0
  %679 = vmatpush1.bf16.msra.mxu0 0
  %680 = vmatprep.subr.bf16.mxu0 0
  %681 = vmatpush1.bf16.msra.mxu0 %v263
  %682 = vmatprep.subr.bf16.mxu0 0
  %683 = vmatpush1.bf16.msra.mxu0 %v262
  %684 = vmatprep.subr.bf16.mxu0 0
  %685 = vmatpush1.bf16.msra.mxu0 %v261
  %686 = vmatprep.subr.bf16.mxu0 0
  %687 = vmatpush1.bf16.msra.mxu0 %v260
  %688 = vmatprep.subr.bf16.mxu0 0
  %689 = vmatpush2.bf16.msra.mxu0 0
  %690 = vmatprep.subr.bf16.mxu0 0
  %691 = vmatpush2.bf16.msra.mxu0 0
  %692 = vmatprep.subr.bf16.mxu0 0
  %693 = vmatpush2.bf16.msra.mxu0 0
  %694 = vmatprep.subr.bf16.mxu0 0
  %695 = vmatpush2.bf16.msra.mxu0 0
  %696 = vmatprep.subr.bf16.mxu0 0
  %697 = vmatpush2.bf16.msra.mxu0 0
  %698 = vmatprep.subr.bf16.mxu0 0
  %699 = vmatpush2.bf16.msra.mxu0 0
  %700 = vmatprep.subr.bf16.mxu0 0
  %701 = vmatpush2.bf16.msra.mxu0 0
  %702 = vmatprep.subr.bf16.mxu0 0
  %703 = vmatpush2.bf16.msra.mxu0 0
  %704 = vmatprep.mubr.bf16.mxu0 0
  %705 = vmatmul.mubr.bf16.gmra.mxu0 %v667
  %v706 = vpop.f32.mrf.mxu0
  %v707 = vadd.f32 %v243, %v706
  %v708 = vpop.f32.mrf.mxu0
  %v709 = vpop.f32.mrf.mxu0
  %v710 = vadd.f32 %v243, %v709
  %v711 = vpop.f32.mrf.mxu0
  %712 = vmatprep.mubr.bf16.mxu0 0
  %713 = vmatmul.mubr.bf16.gmra.mxu0 %v670
  %v714 = vpop.f32.mrf.mxu0
  %v715 = vadd.f32 %v243, %v714
  %v716 = vpop.f32.mrf.mxu0
  %v717 = vpop.f32.mrf.mxu0
  %v718 = vadd.f32 %v243, %v717
  %v719 = vpop.f32.mrf.mxu0
  %720 = vdwg.mxu0
  %v721 = vmax.f32 %v707, 0.0
  %v722 = vmax.f32 %v710, 0.0
  %v723 = vmax.f32 %v715, 0.0
  %v724 = vmax.f32 %v718, 0.0
  %v725 = vpack.c.bf16 %v722, %v721
  %v726 = vpack.c.bf16 %v724, %v723
  %v728 = vsel %vm178, %v725, 0
  %v731 = vsel %vm178, %v726, 0
  %733 = vmatprep.subr.bf16.mxu0 0
  %734 = vmatpush1.bf16.msra.mxu0 0
  %735 = vmatprep.subr.bf16.mxu0 0
  %736 = vmatpush1.bf16.msra.mxu0 0
  %737 = vmatprep.subr.bf16.mxu0 0
  %738 = vmatpush1.bf16.msra.mxu0 0
  %739 = vmatprep.subr.bf16.mxu0 0
  %740 = vmatpush1.bf16.msra.mxu0 0
  %741 = vmatprep.subr.bf16.mxu0 0
  %742 = vmatpush1.bf16.msra.mxu0 %v352
  %743 = vmatprep.subr.bf16.mxu0 0
  %744 = vmatpush1.bf16.msra.mxu0 %v351
  %745 = vmatprep.subr.bf16.mxu0 0
  %746 = vmatpush1.bf16.msra.mxu0 %v350
  %747 = vmatprep.subr.bf16.mxu0 0
  %748 = vmatpush1.bf16.msra.mxu0 %v349
  %749 = vmatprep.subr.bf16.mxu0 0
  %750 = vmatpush2.bf16.msra.mxu0 0
  %751 = vmatprep.subr.bf16.mxu0 0
  %752 = vmatpush2.bf16.msra.mxu0 0
  %753 = vmatprep.subr.bf16.mxu0 0
  %754 = vmatpush2.bf16.msra.mxu0 0
  %755 = vmatprep.subr.bf16.mxu0 0
  %756 = vmatpush2.bf16.msra.mxu0 0
  %757 = vmatprep.subr.bf16.mxu0 0
  %758 = vmatpush2.bf16.msra.mxu0 0
  %759 = vmatprep.subr.bf16.mxu0 0
  %760 = vmatpush2.bf16.msra.mxu0 0
  %761 = vmatprep.subr.bf16.mxu0 0
  %762 = vmatpush2.bf16.msra.mxu0 0
  %763 = vmatprep.subr.bf16.mxu0 0
  %764 = vmatpush2.bf16.msra.mxu0 0
  %765 = vmatprep.mubr.bf16.mxu0 0
  %766 = vmatmul.mubr.bf16.gmra.mxu0 %v728
  %v767 = vpop.f32.mrf.mxu0
  %v768 = vadd.f32 %v332, %v767
  %v769 = vpop.f32.mrf.mxu0
  %v770 = vpop.f32.mrf.mxu0
  %v771 = vadd.f32 %v332, %v770
  %v772 = vpop.f32.mrf.mxu0
  %773 = vmatprep.mubr.bf16.mxu0 0
  %774 = vmatmul.mubr.bf16.gmra.mxu0 %v731
  %v775 = vpop.f32.mrf.mxu0
  %v776 = vadd.f32 %v332, %v775
  %v777 = vpop.f32.mrf.mxu0
  %v778 = vpop.f32.mrf.mxu0
  %v779 = vadd.f32 %v332, %v778
  %v780 = vpop.f32.mrf.mxu0
  %781 = vdwg.mxu0
  %v782 = vmax.f32 %v768, 0.0
  %v783 = vmax.f32 %v771, 0.0
  %v784 = vmax.f32 %v776, 0.0
  %v785 = vmax.f32 %v779, 0.0
  %v786 = vmul.f32 %v782, %v419
  %v787 = vmul.f32 %v783, %v419
  %v788 = vmul.f32 %v784, %v419
  %v789 = vmul.f32 %v785, %v419
  %v790 = vadd.f32 %v786, %v427
  %v791 = vadd.f32 %v787, %v427
  %v792 = vadd.f32 %v788, %v427
  %v793 = vadd.f32 %v789, %v427
  %v794 = vpack.c.bf16 %v791, %v790
  %v795 = vpack.c.bf16 %v793, %v792
  %796 = vmatprep.subr.bf16.mxu0 0
  %797 = vmatpush1.bf16.msra.mxu0 0
  %798 = vmatprep.subr.bf16.mxu0 0
  %799 = vmatpush1.bf16.msra.mxu0 0
  %800 = vmatprep.subr.bf16.mxu0 0
  %801 = vmatpush1.bf16.msra.mxu0 0
  %802 = vmatprep.subr.bf16.mxu0 0
  %803 = vmatpush1.bf16.msra.mxu0 0
  %804 = vmatprep.subr.bf16.mxu0 0
  %805 = vmatpush1.bf16.msra.mxu0 0
  %806 = vmatprep.subr.bf16.mxu0 0
  %807 = vmatpush1.bf16.msra.mxu0 0
  %808 = vmatprep.subr.bf16.mxu0 0
  %809 = vmatpush1.bf16.msra.mxu0 %v795
  %810 = vmatprep.subr.bf16.mxu0 0
  %811 = vmatpush1.bf16.msra.mxu0 %v794
  %812 = vmatprep.subr.bf16.mxu0 0
  %813 = vmatpush2.bf16.msra.mxu0 0
  %814 = vmatprep.subr.bf16.mxu0 0
  %815 = vmatpush2.bf16.msra.mxu0 0
  %816 = vmatprep.subr.bf16.mxu0 0
  %817 = vmatpush2.bf16.msra.mxu0 0
  %818 = vmatprep.subr.bf16.mxu0 0
  %819 = vmatpush2.bf16.msra.mxu0 0
  %820 = vmatprep.subr.bf16.mxu0 0
  %821 = vmatpush2.bf16.msra.mxu0 0
  %822 = vmatprep.subr.bf16.mxu0 0
  %823 = vmatpush2.bf16.msra.mxu0 0
  %824 = vmatprep.subr.bf16.mxu0 0
  %825 = vmatpush2.bf16.msra.mxu0 0
  %826 = vmatprep.subr.bf16.mxu0 0
  %827 = vmatpush2.bf16.msra.mxu0 0
  %828 = vmatprep.mubr.bf16.mxu0 0
  %829 = vmatmul.mubr.bf16.gmra.mxu0 %v435
  %v830 = vpop.f32.mrf.mxu0
  %v831 = vadd.f32 0.0, %v830
  %v832 = vpop.f32.mrf.mxu0
  %v833 = vpop.f32.mrf.mxu0
  %v834 = vpop.f32.mrf.mxu0
  %835 = vdwg.mxu0
  %v836 = vpack.c.bf16 %v831, %v831
  %s837 = scalar_lea.vmem %s5, 32
  %v838 = vld [vmem:[%s837] sm:$0xf]
  %v839 = vld [vmem:[%s837 + $0x4] sm:$0xf]
  %v840 = vld [vmem:[%s837 + $0x8] sm:$0xf]
  %v841 = vld [vmem:[%s837 + $0xc] sm:$0xf]
  %v842 = vld [vmem:[%s837 + $0x10] sm:$0xf]
  %v843 = vld [vmem:[%s837 + $0x14] sm:$0xf]
  %v844 = vld [vmem:[%s837 + $0x18] sm:$0xf]
  %v845 = vld [vmem:[%s837 + $0x1c] sm:$0xf]
  %v854 = vunpack.c.l.b16 %v838
  %v855 = vunpack.c.l.b16 %v839
  %v856 = vunpack.c.l.b16 %v840
  %v857 = vunpack.c.l.b16 %v841
  %v858 = vunpack.c.l.b16 %v842
  %v859 = vunpack.c.l.b16 %v843
  %v860 = vunpack.c.l.b16 %v844
  %v861 = vunpack.c.l.b16 %v845
  %v862 = vpack.c.b16 %v855, %v854
  %v863 = vpack.c.b16 %v857, %v856
  %v864 = vpack.c.b16 %v859, %v858
  %v865 = vpack.c.b16 %v861, %v860
  %v871 = vsel %vm178, %v836, 0
  %873 = vmatprep.subr.bf16.mxu0 0
  %874 = vmatpush1.bf16.msra.mxu0 0
  %875 = vmatprep.subr.bf16.mxu0 0
  %876 = vmatpush1.bf16.msra.mxu0 0
  %877 = vmatprep.subr.bf16.mxu0 0
  %878 = vmatpush1.bf16.msra.mxu0 0
  %879 = vmatprep.subr.bf16.mxu0 0
  %880 = vmatpush1.bf16.msra.mxu0 0
  %881 = vmatprep.subr.bf16.mxu0 0
  %882 = vmatpush1.bf16.msra.mxu0 %v865
  %883 = vmatprep.subr.bf16.mxu0 0
  %884 = vmatpush1.bf16.msra.mxu0 %v864
  %885 = vmatprep.subr.bf16.mxu0 0
  %886 = vmatpush1.bf16.msra.mxu0 %v863
  %887 = vmatprep.subr.bf16.mxu0 0
  %888 = vmatpush1.bf16.msra.mxu0 %v862
  %889 = vmatprep.subr.bf16.mxu0 0
  %890 = vmatpush2.bf16.msra.mxu0 0
  %891 = vmatprep.subr.bf16.mxu0 0
  %892 = vmatpush2.bf16.msra.mxu0 0
  %893 = vmatprep.subr.bf16.mxu0 0
  %894 = vmatpush2.bf16.msra.mxu0 0
  %895 = vmatprep.subr.bf16.mxu0 0
  %896 = vmatpush2.bf16.msra.mxu0 0
  %897 = vmatprep.subr.bf16.mxu0 0
  %898 = vmatpush2.bf16.msra.mxu0 0
  %899 = vmatprep.subr.bf16.mxu0 0
  %900 = vmatpush2.bf16.msra.mxu0 0
  %901 = vmatprep.subr.bf16.mxu0 0
  %902 = vmatpush2.bf16.msra.mxu0 0
  %903 = vmatprep.subr.bf16.mxu0 0
  %904 = vmatpush2.bf16.msra.mxu0 0
  %905 = vmatprep.mubr.bf16.mxu0 0
  %906 = vmatmul.mubr.bf16.gmra.mxu0 %v871
  %v907 = vpop.f32.mrf.mxu0
  %v908 = vadd.f32 0.0, %v907
  %v909 = vpop.f32.mrf.mxu0
  %v910 = vpop.f32.mrf.mxu0
  %v911 = vpop.f32.mrf.mxu0
  %912 = vdwg.mxu0
  %v913 = vadd.f32 %v553, %v908
  %914 = vmatprep.subr.bf16.mxu0 0
  %915 = vmatpush1.bf16.msra.mxu0 0
  %916 = vmatprep.subr.bf16.mxu0 0
  %917 = vmatpush1.bf16.msra.mxu0 0
  %918 = vmatprep.subr.bf16.mxu0 0
  %919 = vmatpush1.bf16.msra.mxu0 0
  %920 = vmatprep.subr.bf16.mxu0 0
  %921 = vmatpush1.bf16.msra.mxu0 0
  %922 = vmatprep.subr.bf16.mxu0 0
  %923 = vmatpush1.bf16.msra.mxu0 0
  %924 = vmatprep.subr.bf16.mxu0 0
  %925 = vmatpush1.bf16.msra.mxu0 0
  %926 = vmatprep.subr.bf16.mxu0 0
  %927 = vmatpush1.bf16.msra.mxu0 %v795
  %928 = vmatprep.subr.bf16.mxu0 0
  %929 = vmatpush1.bf16.msra.mxu0 %v794
  %930 = vmatprep.subr.bf16.mxu0 0
  %931 = vmatpush2.bf16.msra.mxu0 0
  %932 = vmatprep.subr.bf16.mxu0 0
  %933 = vmatpush2.bf16.msra.mxu0 0
  %934 = vmatprep.subr.bf16.mxu0 0
  %935 = vmatpush2.bf16.msra.mxu0 0
  %936 = vmatprep.subr.bf16.mxu0 0
  %937 = vmatpush2.bf16.msra.mxu0 0
  %938 = vmatprep.subr.bf16.mxu0 0
  %939 = vmatpush2.bf16.msra.mxu0 0
  %940 = vmatprep.subr.bf16.mxu0 0
  %941 = vmatpush2.bf16.msra.mxu0 0
  %942 = vmatprep.subr.bf16.mxu0 0
  %943 = vmatpush2.bf16.msra.mxu0 0
  %944 = vmatprep.subr.bf16.mxu0 0
  %945 = vmatpush2.bf16.msra.mxu0 0
  %946 = vmatprep.mubr.bf16.mxu0 0
  %947 = vmatmul.mubr.bf16.gmra.mxu0 %v94
  %v948 = vpop.f32.mrf.mxu0
  %v949 = vadd.f32 0.0, %v948
  %v950 = vpop.f32.mrf.mxu0
  %v951 = vpop.f32.mrf.mxu0
  %v952 = vadd.f32 0.0, %v951
  %v953 = vpop.f32.mrf.mxu0
  %954 = vmatprep.mubr.bf16.mxu0 0
  %955 = vmatmul.mubr.bf16.gmra.mxu0 %v97
  %v956 = vpop.f32.mrf.mxu0
  %v957 = vadd.f32 0.0, %v956
  %v958 = vpop.f32.mrf.mxu0
  %v959 = vpop.f32.mrf.mxu0
  %v960 = vadd.f32 0.0, %v959
  %v961 = vpop.f32.mrf.mxu0
  %962 = vdwg.mxu0
  %v963 = vpack.c.bf16 %v952, %v949
  %v964 = vpack.c.bf16 %v960, %v957
  %v966 = vsel %vm178, %v963, 0
  %v969 = vsel %vm178, %v964, 0
  %971 = vmatprep.subr.bf16.mxu0 0
  %972 = vmatpush1.bf16.msra.mxu0 0
  %973 = vmatprep.subr.bf16.mxu0 0
  %974 = vmatpush1.bf16.msra.mxu0 0
  %975 = vmatprep.subr.bf16.mxu0 0
  %976 = vmatpush1.bf16.msra.mxu0 0
  %977 = vmatprep.subr.bf16.mxu0 0
  %978 = vmatpush1.bf16.msra.mxu0 0
  %979 = vmatprep.subr.bf16.mxu0 0
  %980 = vmatpush1.bf16.msra.mxu0 %v173
  %981 = vmatprep.subr.bf16.mxu0 0
  %982 = vmatpush1.bf16.msra.mxu0 %v172
  %983 = vmatprep.subr.bf16.mxu0 0
  %984 = vmatpush1.bf16.msra.mxu0 %v171
  %985 = vmatprep.subr.bf16.mxu0 0
  %986 = vmatpush1.bf16.msra.mxu0 %v170
  %987 = vmatprep.subr.bf16.mxu0 0
  %988 = vmatpush2.bf16.msra.mxu0 0
  %989 = vmatprep.subr.bf16.mxu0 0
  %990 = vmatpush2.bf16.msra.mxu0 0
  %991 = vmatprep.subr.bf16.mxu0 0
  %992 = vmatpush2.bf16.msra.mxu0 0
  %993 = vmatprep.subr.bf16.mxu0 0
  %994 = vmatpush2.bf16.msra.mxu0 0
  %995 = vmatprep.subr.bf16.mxu0 0
  %996 = vmatpush2.bf16.msra.mxu0 0
  %997 = vmatprep.subr.bf16.mxu0 0
  %998 = vmatpush2.bf16.msra.mxu0 0
  %999 = vmatprep.subr.bf16.mxu0 0
  %1000 = vmatpush2.bf16.msra.mxu0 0
  %1001 = vmatprep.subr.bf16.mxu0 0
  %1002 = vmatpush2.bf16.msra.mxu0 0
  %1003 = vmatprep.mubr.bf16.mxu0 0
  %1004 = vmatmul.mubr.bf16.gmra.mxu0 %v966
  %v1005 = vpop.f32.mrf.mxu0
  %v1006 = vadd.f32 %v153, %v1005
  %v1007 = vpop.f32.mrf.mxu0
  %v1008 = vpop.f32.mrf.mxu0
  %v1009 = vadd.f32 %v153, %v1008
  %v1010 = vpop.f32.mrf.mxu0
  %1011 = vmatprep.mubr.bf16.mxu0 0
  %1012 = vmatmul.mubr.bf16.gmra.mxu0 %v969
  %v1013 = vpop.f32.mrf.mxu0
  %v1014 = vadd.f32 %v153, %v1013
  %v1015 = vpop.f32.mrf.mxu0
  %v1016 = vpop.f32.mrf.mxu0
  %v1017 = vadd.f32 %v153, %v1016
  %v1018 = vpop.f32.mrf.mxu0
  %1019 = vdwg.mxu0
  %v1020 = vmax.f32 %v1006, 0.0
  %v1021 = vmax.f32 %v1009, 0.0
  %v1022 = vmax.f32 %v1014, 0.0
  %v1023 = vmax.f32 %v1017, 0.0
  %v1024 = vpack.c.bf16 %v1021, %v1020
  %v1025 = vpack.c.bf16 %v1023, %v1022
  %v1027 = vsel %vm178, %v1024, 0
  %v1030 = vsel %vm178, %v1025, 0
  %1032 = vmatprep.subr.bf16.mxu0 0
  %1033 = vmatpush1.bf16.msra.mxu0 0
  %1034 = vmatprep.subr.bf16.mxu0 0
  %1035 = vmatpush1.bf16.msra.mxu0 0
  %1036 = vmatprep.subr.bf16.mxu0 0
  %1037 = vmatpush1.bf16.msra.mxu0 0
  %1038 = vmatprep.subr.bf16.mxu0 0
  %1039 = vmatpush1.bf16.msra.mxu0 0
  %1040 = vmatprep.subr.bf16.mxu0 0
  %1041 = vmatpush1.bf16.msra.mxu0 %v263
  %1042 = vmatprep.subr.bf16.mxu0 0
  %1043 = vmatpush1.bf16.msra.mxu0 %v262
  %1044 = vmatprep.subr.bf16.mxu0 0
  %1045 = vmatpush1.bf16.msra.mxu0 %v261
  %1046 = vmatprep.subr.bf16.mxu0 0
  %1047 = vmatpush1.bf16.msra.mxu0 %v260
  %1048 = vmatprep.subr.bf16.mxu0 0
  %1049 = vmatpush2.bf16.msra.mxu0 0
  %1050 = vmatprep.subr.bf16.mxu0 0
  %1051 = vmatpush2.bf16.msra.mxu0 0
  %1052 = vmatprep.subr.bf16.mxu0 0
  %1053 = vmatpush2.bf16.msra.mxu0 0
  %1054 = vmatprep.subr.bf16.mxu0 0
  %1055 = vmatpush2.bf16.msra.mxu0 0
  %1056 = vmatprep.subr.bf16.mxu0 0
  %1057 = vmatpush2.bf16.msra.mxu0 0
  %1058 = vmatprep.subr.bf16.mxu0 0
  %1059 = vmatpush2.bf16.msra.mxu0 0
  %1060 = vmatprep.subr.bf16.mxu0 0
  %1061 = vmatpush2.bf16.msra.mxu0 0
  %1062 = vmatprep.subr.bf16.mxu0 0
  %1063 = vmatpush2.bf16.msra.mxu0 0
  %1064 = vmatprep.mubr.bf16.mxu0 0
  %1065 = vmatmul.mubr.bf16.gmra.mxu0 %v1027
  %v1066 = vpop.f32.mrf.mxu0
  %v1067 = vadd.f32 %v243, %v1066
  %v1068 = vpop.f32.mrf.mxu0
  %v1069 = vpop.f32.mrf.mxu0
  %v1070 = vadd.f32 %v243, %v1069
  %v1071 = vpop.f32.mrf.mxu0
  %1072 = vmatprep.mubr.bf16.mxu0 0
  %1073 = vmatmul.mubr.bf16.gmra.mxu0 %v1030
  %v1074 = vpop.f32.mrf.mxu0
  %v1075 = vadd.f32 %v243, %v1074
  %v1076 = vpop.f32.mrf.mxu0
  %v1077 = vpop.f32.mrf.mxu0
  %v1078 = vadd.f32 %v243, %v1077
  %v1079 = vpop.f32.mrf.mxu0
  %1080 = vdwg.mxu0
  %v1081 = vmax.f32 %v1067, 0.0
  %v1082 = vmax.f32 %v1070, 0.0
  %v1083 = vmax.f32 %v1075, 0.0
  %v1084 = vmax.f32 %v1078, 0.0
  %v1085 = vpack.c.bf16 %v1082, %v1081
  %v1086 = vpack.c.bf16 %v1084, %v1083
  %v1088 = vsel %vm178, %v1085, 0
  %v1091 = vsel %vm178, %v1086, 0
  %1093 = vmatprep.subr.bf16.mxu0 0
  %1094 = vmatpush1.bf16.msra.mxu0 0
  %1095 = vmatprep.subr.bf16.mxu0 0
  %1096 = vmatpush1.bf16.msra.mxu0 0
  %1097 = vmatprep.subr.bf16.mxu0 0
  %1098 = vmatpush1.bf16.msra.mxu0 0
  %1099 = vmatprep.subr.bf16.mxu0 0
  %1100 = vmatpush1.bf16.msra.mxu0 0
  %1101 = vmatprep.subr.bf16.mxu0 0
  %1102 = vmatpush1.bf16.msra.mxu0 %v352
  %1103 = vmatprep.subr.bf16.mxu0 0
  %1104 = vmatpush1.bf16.msra.mxu0 %v351
  %1105 = vmatprep.subr.bf16.mxu0 0
  %1106 = vmatpush1.bf16.msra.mxu0 %v350
  %1107 = vmatprep.subr.bf16.mxu0 0
  %1108 = vmatpush1.bf16.msra.mxu0 %v349
  %1109 = vmatprep.subr.bf16.mxu0 0
  %1110 = vmatpush2.bf16.msra.mxu0 0
  %1111 = vmatprep.subr.bf16.mxu0 0
  %1112 = vmatpush2.bf16.msra.mxu0 0
  %1113 = vmatprep.subr.bf16.mxu0 0
  %1114 = vmatpush2.bf16.msra.mxu0 0
  %1115 = vmatprep.subr.bf16.mxu0 0
  %1116 = vmatpush2.bf16.msra.mxu0 0
  %1117 = vmatprep.subr.bf16.mxu0 0
  %1118 = vmatpush2.bf16.msra.mxu0 0
  %1119 = vmatprep.subr.bf16.mxu0 0
  %1120 = vmatpush2.bf16.msra.mxu0 0
  %1121 = vmatprep.subr.bf16.mxu0 0
  %1122 = vmatpush2.bf16.msra.mxu0 0
  %1123 = vmatprep.subr.bf16.mxu0 0
  %1124 = vmatpush2.bf16.msra.mxu0 0
  %1125 = vmatprep.mubr.bf16.mxu0 0
  %1126 = vmatmul.mubr.bf16.gmra.mxu0 %v1088
  %v1127 = vpop.f32.mrf.mxu0
  %v1128 = vadd.f32 %v332, %v1127
  %v1129 = vpop.f32.mrf.mxu0
  %v1130 = vpop.f32.mrf.mxu0
  %v1131 = vadd.f32 %v332, %v1130
  %v1132 = vpop.f32.mrf.mxu0
  %1133 = vmatprep.mubr.bf16.mxu0 0
  %1134 = vmatmul.mubr.bf16.gmra.mxu0 %v1091
  %v1135 = vpop.f32.mrf.mxu0
  %v1136 = vadd.f32 %v332, %v1135
  %v1137 = vpop.f32.mrf.mxu0
  %v1138 = vpop.f32.mrf.mxu0
  %v1139 = vadd.f32 %v332, %v1138
  %v1140 = vpop.f32.mrf.mxu0
  %1141 = vdwg.mxu0
  %v1142 = vmax.f32 %v1128, 0.0
  %v1143 = vmax.f32 %v1131, 0.0
  %v1144 = vmax.f32 %v1136, 0.0
  %v1145 = vmax.f32 %v1139, 0.0
  %v1146 = vmul.f32 %v1142, %v419
  %v1147 = vmul.f32 %v1143, %v419
  %v1148 = vmul.f32 %v1144, %v419
  %v1149 = vmul.f32 %v1145, %v419
  %v1150 = vadd.f32 %v1146, %v427
  %v1151 = vadd.f32 %v1147, %v427
  %v1152 = vadd.f32 %v1148, %v427
  %v1153 = vadd.f32 %v1149, %v427
  %v1154 = vpack.c.bf16 %v1151, %v1150
  %v1155 = vpack.c.bf16 %v1153, %v1152
  %1156 = vmatprep.subr.bf16.mxu0 0
  %1157 = vmatpush1.bf16.msra.mxu0 0
  %1158 = vmatprep.subr.bf16.mxu0 0
  %1159 = vmatpush1.bf16.msra.mxu0 0
  %1160 = vmatprep.subr.bf16.mxu0 0
  %1161 = vmatpush1.bf16.msra.mxu0 0
  %1162 = vmatprep.subr.bf16.mxu0 0
  %1163 = vmatpush1.bf16.msra.mxu0 0
  %1164 = vmatprep.subr.bf16.mxu0 0
  %1165 = vmatpush1.bf16.msra.mxu0 0
  %1166 = vmatprep.subr.bf16.mxu0 0
  %1167 = vmatpush1.bf16.msra.mxu0 0
  %1168 = vmatprep.subr.bf16.mxu0 0
  %1169 = vmatpush1.bf16.msra.mxu0 %v1155
  %1170 = vmatprep.subr.bf16.mxu0 0
  %1171 = vmatpush1.bf16.msra.mxu0 %v1154
  %1172 = vmatprep.subr.bf16.mxu0 0
  %1173 = vmatpush2.bf16.msra.mxu0 0
  %1174 = vmatprep.subr.bf16.mxu0 0
  %1175 = vmatpush2.bf16.msra.mxu0 0
  %1176 = vmatprep.subr.bf16.mxu0 0
  %1177 = vmatpush2.bf16.msra.mxu0 0
  %1178 = vmatprep.subr.bf16.mxu0 0
  %1179 = vmatpush2.bf16.msra.mxu0 0
  %1180 = vmatprep.subr.bf16.mxu0 0
  %1181 = vmatpush2.bf16.msra.mxu0 0
  %1182 = vmatprep.subr.bf16.mxu0 0
  %1183 = vmatpush2.bf16.msra.mxu0 0
  %1184 = vmatprep.subr.bf16.mxu0 0
  %1185 = vmatpush2.bf16.msra.mxu0 0
  %1186 = vmatprep.subr.bf16.mxu0 0
  %1187 = vmatpush2.bf16.msra.mxu0 0
  %1188 = vmatprep.mubr.bf16.mxu0 0
  %1189 = vmatmul.mubr.bf16.gmra.mxu0 %v435
  %v1190 = vpop.f32.mrf.mxu0
  %v1191 = vadd.f32 0.0, %v1190
  %v1192 = vpop.f32.mrf.mxu0
  %v1193 = vpop.f32.mrf.mxu0
  %v1194 = vpop.f32.mrf.mxu0
  %1195 = vdwg.mxu0
  %v1196 = vpack.c.bf16 %v1191, %v1191
  %s1197 = scalar_lea.vmem %s5, 64
  %v1198 = vld [vmem:[%s1197] sm:$0xf]
  %v1199 = vld [vmem:[%s1197 + $0x4] sm:$0xf]
  %v1200 = vld [vmem:[%s1197 + $0x8] sm:$0xf]
  %v1201 = vld [vmem:[%s1197 + $0xc] sm:$0xf]
  %v1202 = vld [vmem:[%s1197 + $0x10] sm:$0xf]
  %v1203 = vld [vmem:[%s1197 + $0x14] sm:$0xf]
  %v1204 = vld [vmem:[%s1197 + $0x18] sm:$0xf]
  %v1205 = vld [vmem:[%s1197 + $0x1c] sm:$0xf]
  %v1214 = vunpack.c.l.b16 %v1198
  %v1215 = vunpack.c.l.b16 %v1199
  %v1216 = vunpack.c.l.b16 %v1200
  %v1217 = vunpack.c.l.b16 %v1201
  %v1218 = vunpack.c.l.b16 %v1202
  %v1219 = vunpack.c.l.b16 %v1203
  %v1220 = vunpack.c.l.b16 %v1204
  %v1221 = vunpack.c.l.b16 %v1205
  %v1222 = vpack.c.b16 %v1215, %v1214
  %v1223 = vpack.c.b16 %v1217, %v1216
  %v1224 = vpack.c.b16 %v1219, %v1218
  %v1225 = vpack.c.b16 %v1221, %v1220
  %v1231 = vsel %vm178, %v1196, 0
  %1233 = vmatprep.subr.bf16.mxu0 0
  %1234 = vmatpush1.bf16.msra.mxu0 0
  %1235 = vmatprep.subr.bf16.mxu0 0
  %1236 = vmatpush1.bf16.msra.mxu0 0
  %1237 = vmatprep.subr.bf16.mxu0 0
  %1238 = vmatpush1.bf16.msra.mxu0 0
  %1239 = vmatprep.subr.bf16.mxu0 0
  %1240 = vmatpush1.bf16.msra.mxu0 0
  %1241 = vmatprep.subr.bf16.mxu0 0
  %1242 = vmatpush1.bf16.msra.mxu0 %v1225
  %1243 = vmatprep.subr.bf16.mxu0 0
  %1244 = vmatpush1.bf16.msra.mxu0 %v1224
  %1245 = vmatprep.subr.bf16.mxu0 0
  %1246 = vmatpush1.bf16.msra.mxu0 %v1223
  %1247 = vmatprep.subr.bf16.mxu0 0
  %1248 = vmatpush1.bf16.msra.mxu0 %v1222
  %1249 = vmatprep.subr.bf16.mxu0 0
  %1250 = vmatpush2.bf16.msra.mxu0 0
  %1251 = vmatprep.subr.bf16.mxu0 0
  %1252 = vmatpush2.bf16.msra.mxu0 0
  %1253 = vmatprep.subr.bf16.mxu0 0
  %1254 = vmatpush2.bf16.msra.mxu0 0
  %1255 = vmatprep.subr.bf16.mxu0 0
  %1256 = vmatpush2.bf16.msra.mxu0 0
  %1257 = vmatprep.subr.bf16.mxu0 0
  %1258 = vmatpush2.bf16.msra.mxu0 0
  %1259 = vmatprep.subr.bf16.mxu0 0
  %1260 = vmatpush2.bf16.msra.mxu0 0
  %1261 = vmatprep.subr.bf16.mxu0 0
  %1262 = vmatpush2.bf16.msra.mxu0 0
  %1263 = vmatprep.subr.bf16.mxu0 0
  %1264 = vmatpush2.bf16.msra.mxu0 0
  %1265 = vmatprep.mubr.bf16.mxu0 0
  %1266 = vmatmul.mubr.bf16.gmra.mxu0 %v1231
  %v1267 = vpop.f32.mrf.mxu0
  %v1268 = vadd.f32 0.0, %v1267
  %v1269 = vpop.f32.mrf.mxu0
  %v1270 = vpop.f32.mrf.mxu0
  %v1271 = vpop.f32.mrf.mxu0
  %1272 = vdwg.mxu0
  %v1273 = vadd.f32 %v913, %v1268
  %1274 = vst [vmem:[%s7] sm:$0xff] %v1273
  // Predicated region
  $region30: #{dapp_classifier_forward.1} parent=0 // pred_check
    _
  $region31: #{dapp_classifier_forward.1} parent=0 // pred_check_branch
    %1276 = sbr.rel (0) target = $region33
  $region32: #{dapp_classifier_forward.1} parent=0 // pred_region
    _
  $region33: #{dapp_classifier_forward.1} parent=0 // pred_fallthru
    _
  // Predicated region
  $region34: #{dapp_classifier_forward.1} parent=0 // pred_check
    _
  $region35: #{dapp_classifier_forward.1} parent=0 // pred_check_branch
    %1278 = sbr.rel (0) target = $region37
  $region36: #{dapp_classifier_forward.1} parent=0 // pred_region
    _
  $region37: #{dapp_classifier_forward.1} parent=0 // pred_fallthru
    _

</llo_original>
